<compile_context>
chip_gen: v6e
topology: v6e:2x2x1
jax: 0.10.0
libtpu: 0.0.40
codegen_flags: <defaults>
</compile_context>

<pallas_src>
import math
from functools import partial

import jax
import jax.numpy as jnp
from jax.experimental import pallas as pl
from jax.experimental.pallas import tpu as pltpu

EPS = 1e-8
STAT_LANES = 128        # lane width of the small statistics outputs
# Approximate EUP reciprocals (fast path).  Set False for exact-division
# parity with the PyTorch reference (approx differs by ~1e-3 relative).
APPROX_RECIP = True


def _round_up(x, m):
    return ((x + m - 1) // m) * m


# ----------------------------------------------------------------------------
# Tile geometry / VMEM sizing
# ----------------------------------------------------------------------------
def _pick_tiles(n_total, d_in_pad, d_h_pad, d_cls_pad, num_layers):
    """Row-tile policy: biggest 128/256-multiple tile that fits the budget."""
    # per-row VMEM bytes: streamed bf16 input + f32 stat outputs (x2 buffers),
    # plus live f32 activations and the bf16 classifier feature stash.
    per_row = (2 * 2 * d_in_pad
               + 2 * 4 * (STAT_LANES + d_cls_pad)
               + 4 * (d_in_pad + 4 * d_h_pad)
               + 2 * (num_layers - 1) * d_h_pad)
    # weights/biases/classifier (bf16 / f32), double-buffered by the pipeline.
    weight_bytes = 2 * (2 * (d_in_pad * d_h_pad
                             + (num_layers - 1) * d_h_pad * d_h_pad
                             + (num_layers - 1) * d_h_pad * d_cls_pad)
                        + 4 * num_layers * d_h_pad)
    budget = (44 << 20) - weight_bytes                 # safe on v5e/v6e/v7x
    tile_cap = 512                                     # multiple of 256 & 128
    while tile_cap > 128 and tile_cap * per_row > budget:
        tile_cap //= 2

    if n_total >= 2 * tile_cap:
        tile_rows = tile_cap
        rows_pad = _round_up(n_total, tile_rows)
        num_tiles = rows_pad // tile_rows
    else:
        # Small problem: cover all rows with at most two tiles (two tiles keep
        # both v7x TensorCores busy); 16-row multiples keep bf16 sublane tiling.
        num_tiles = 2 if n_total > 16 else 1
        tile_rows = _round_up(-(-n_total // num_tiles), 16)
        rows_pad = tile_rows * num_tiles
    return tile_rows, num_tiles, rows_pad


def _vmem_limit(tile_rows, d_in_pad, d_h_pad, d_cls_pad, num_layers, use_peer):
    bf16, f32 = 2, 4
    weights = ((d_in_pad * d_h_pad
                + (num_layers - 1) * d_h_pad * d_h_pad
                + (num_layers - 1) * d_h_pad * d_cls_pad) * bf16
               + num_layers * d_h_pad * f32)
    streams = (tile_rows * d_in_pad * bf16
               + tile_rows * (STAT_LANES + d_cls_pad) * f32)
    if use_peer:
        streams += num_layers * d_h_pad * f32
    live = (tile_rows * (d_in_pad + 4 * d_h_pad) * f32
            + tile_rows * (num_layers - 1) * d_h_pad * bf16)
    total = 2 * (weights + streams) + live             # x2: double-buffering
    total = int(total * 1.25) + (4 << 20)              # headroom
    return max(16 << 20, min(total, 56 << 20))         # <= 64 MiB v7x VMEM


# ----------------------------------------------------------------------------
# Fused FF-stack + classifier kernel
# ----------------------------------------------------------------------------
def _fused_ff_kernel(z_ref, w0_ref, wr_ref, b_ref, wc_ref, *out_refs,
                     batch_size, num_layers, d_in, hidden, d_h_pad,
                     tile_rows, use_peer):
    if use_peer:
        ss_ref, psum_ref, cls_ref = out_refs
    else:
        ss_ref, cls_ref = out_refs

    # ---- initial layer norm (f32 VPU/EUP math; padded lanes are zero) -------
    z = z_ref[...].astype(jnp.float32)
    ms = jnp.sum(z * z, axis=-1, keepdims=True) * (1.0 / d_in)
    inv = pl.reciprocal(jnp.sqrt(ms) + EPS, approx=APPROX_RECIP)
    zb = (z * inv).astype(jnp.bfloat16)                 # bf16 MXU operand

    # Lane-dense ss slab: zero lanes >= num_layers once, then narrow-store each
    # layer's sum-of-squares column directly into the output block.
    ss_ref[...] = jnp.zeros((tile_rows, STAT_LANES), jnp.float32)

    if use_peer:
        tile = pl.program_id(0)
        row = (tile * tile_rows
               + jax.lax.broadcasted_iota(jnp.int32, (tile_rows, 1), 0))
        pos_mask = (row < batch_size).astype(jnp.float32)            # (T, 1)
        layer_iota = jax.lax.broadcasted_iota(
            jnp.int32, (num_layers, d_h_pad), 0)
        psum_acc = jnp.zeros((num_layers, d_h_pad), jnp.float32)

    cls_feats = []

    for idx in range(num_layers):                       # static unroll
        w = w0_ref[...] if idx == 0 else wr_ref[idx - 1]
        h = jnp.dot(zb, w, preferred_element_type=jnp.float32)       # f32 acc
        h = h + b_ref[pl.ds(idx, 1), :]
        h = jnp.maximum(h, 0.0)                         # ReLU_full_grad fwd

        ss = jnp.sum(h * h, axis=-1, keepdims=True)     # (T, 1) f32
        ss_ref[:, pl.ds(idx, 1)] = ss

        if use_peer:
            colsum = jnp.sum(h * pos_mask, axis=0, keepdims=True)    # (1, DH)
            psum_acc = jnp.where(layer_iota == idx, colsum, psum_acc)

        # FF "layer norm": divide by sqrt(mean over the TRUE hidden width)
        denom = jnp.sqrt(ss * (1.0 / hidden)) + EPS
        zb = (h * pl.reciprocal(denom, approx=APPROX_RECIP)).astype(jnp.bfloat16)

        if idx >= 1:                                    # classifier features
            cls_feats.append(zb)

    if use_peer:
        psum_ref[0] = psum_acc                          # one unmasked store

    # single fused classifier matmul over the stacked per-layer features
    zcat = jnp.concatenate(cls_feats, axis=-1)          # (T, (L-1)*DH) bf16
    cls_ref[...] = jnp.dot(zcat, wc_ref[...], preferred_element_type=jnp.float32)


def fused_ff_stack(z_pad, w0, w_rest, biases, wc, *, batch_size, num_layers,
                   d_in, hidden, d_h_pad, d_cls_pad, tile_rows, num_tiles,
                   use_peer):
    rows_pad = num_tiles * tile_rows
    d_in_pad = z_pad.shape[1]

    kernel = partial(_fused_ff_kernel, batch_size=batch_size,
                     num_layers=num_layers, d_in=d_in, hidden=hidden,
                     d_h_pad=d_h_pad, tile_rows=tile_rows, use_peer=use_peer)

    in_specs = [
        # row tile of the (padded, bf16) input — the only per-tile HBM stream
        pl.BlockSpec((tile_rows, d_in_pad), lambda i: (i, 0)),
        # weights / biases / classifier: constant index_map -> VMEM-resident
        # across row tiles (one DMA each).
        pl.BlockSpec((d_in_pad, d_h_pad), lambda i: (0, 0)),
        pl.BlockSpec((num_layers - 1, d_h_pad, d_h_pad), lambda i: (0, 0, 0)),
        pl.BlockSpec((num_layers, d_h_pad), lambda i: (0, 0)),
        pl.BlockSpec(((num_layers - 1) * d_h_pad, d_cls_pad), lambda i: (0, 0)),
    ]

    out_shape = [jax.ShapeDtypeStruct((rows_pad, STAT_LANES), jnp.float32)]
    out_specs = [pl.BlockSpec((tile_rows, STAT_LANES), lambda i: (i, 0))]
    if use_peer:
        out_shape.append(jax.ShapeDtypeStruct((num_tiles, num_layers, d_h_pad),
                                              jnp.float32))
        out_specs.append(pl.BlockSpec((1, num_layers, d_h_pad),
                                      lambda i: (i, 0, 0)))
    out_shape.append(jax.ShapeDtypeStruct((rows_pad, d_cls_pad), jnp.float32))
    out_specs.append(pl.BlockSpec((tile_rows, d_cls_pad), lambda i: (i, 0)))

    flops = 2 * rows_pad * (d_in_pad * d_h_pad
                            + (num_layers - 1) * d_h_pad * d_h_pad
                            + (num_layers - 1) * d_h_pad * d_cls_pad)
    bytes_accessed = (2 * (rows_pad * d_in_pad + w0.size + w_rest.size + wc.size)
                      + 4 * (biases.size + rows_pad * (STAT_LANES + d_cls_pad)
                             + (num_tiles * num_layers * d_h_pad if use_peer
                                else 0)))

    grid_spec = pltpu.PrefetchScalarGridSpec(
        num_scalar_prefetch=0, grid=(num_tiles,),
        in_specs=in_specs, out_specs=out_specs)

    return pl.pallas_call(
        kernel,
        grid_spec=grid_spec,
        out_shape=tuple(out_shape),
        compiler_params=pltpu.CompilerParams(
            dimension_semantics=("parallel",),
            vmem_limit_bytes=_vmem_limit(tile_rows, d_in_pad, d_h_pad,
                                         d_cls_pad, num_layers, use_peer)),
        cost_estimate=pl.CostEstimate(
            flops=flops,
            transcendentals=2 * rows_pad * (num_layers + 1),
            bytes_accessed=bytes_accessed),
    )(z_pad, w0, w_rest, biases, wc)


# ----------------------------------------------------------------------------
# Loss helpers (plain JAX glue)
# ----------------------------------------------------------------------------
def bce_with_logits(logits, targets):
    # torch.nn.BCEWithLogitsLoss (mean reduction)
    return jnp.mean(jnp.maximum(logits, 0.0) - logits * targets
                    + jnp.log1p(jnp.exp(-jnp.abs(logits))))


def cross_entropy(logits, labels):
    # torch.nn.CrossEntropyLoss (mean reduction)
    logz = jax.nn.logsumexp(logits, axis=-1)
    picked = jnp.take_along_axis(logits, labels[:, None], axis=-1)[:, 0]
    return jnp.mean(logz - picked)


# ----------------------------------------------------------------------------
# FF_model forward
# ----------------------------------------------------------------------------
def ff_model_forward(params, running_means, inputs, labels, opt):
    batch_size = opt["batch_size"]
    momentum = opt["momentum"]
    peer_coef = opt["peer_normalization"]
    num_layers = opt["num_layers"]
    hidden = opt["hidden_dim"]
    use_peer = peer_coef > 0
    assert 2 <= num_layers <= STAT_LANES

    # ----- merged row block: [pos ; neg ; neutral] ----------------------------
    pos = inputs["pos_images"].reshape(inputs["pos_images"].shape[0], -1)
    neg = inputs["neg_images"].reshape(inputs["neg_images"].shape[0], -1)
    neu = inputs["neutral_sample"].reshape(inputs["neutral_sample"].shape[0], -1)
    d_in = pos.shape[1]
    n_posneg = pos.shape[0] + neg.shape[0]
    z_all = jnp.concatenate([pos, neg, neu], axis=0).astype(jnp.float32)
    n_total = z_all.shape[0]

    # ----- padded / tiled geometry --------------------------------------------
    n_classes = params["classifier"].shape[1]
    d_in_pad = _round_up(d_in, 128)
    d_h_pad = _round_up(hidden, 128)
    d_cls_pad = _round_up(n_classes, 128)
    tile_rows, num_tiles, rows_pad = _pick_tiles(
        n_total, d_in_pad, d_h_pad, d_cls_pad, num_layers)

    # bf16 MXU operands (f32 accumulation in-kernel); halves the z HBM stream.
    z_pad = jnp.pad(z_all, ((0, rows_pad - n_total),
                            (0, d_in_pad - d_in))).astype(jnp.bfloat16)

    # ----- zero-padded parameters (zero lanes keep the math exact) ------------
    w0, b0 = params["layers"][0]
    w0p = jnp.pad(w0, ((0, d_in_pad - d_in),
                       (0, d_h_pad - hidden))).astype(jnp.bfloat16)
    w_rest, biases = [], [jnp.pad(b0, (0, d_h_pad - hidden))]
    for idx in range(1, num_layers):
        w, b = params["layers"][idx]
        w_rest.append(jnp.pad(w, ((0, d_h_pad - hidden), (0, d_h_pad - hidden))))
        biases.append(jnp.pad(b, (0, d_h_pad - hidden)))
    w_rest = jnp.stack(w_rest, axis=0).astype(jnp.bfloat16)   # (L-1, DH, DH)
    biases = jnp.stack(biases, axis=0).astype(jnp.float32)    # (L, DH) f32

    wc = params["classifier"]                                 # (hidden*(L-1), 10)
    wc_blocks = [
        jnp.pad(wc[i * hidden:(i + 1) * hidden],
                ((0, d_h_pad - hidden), (0, d_cls_pad - n_classes)))
        for i in range(num_layers - 1)
    ]
    wcp = jnp.concatenate(wc_blocks, axis=0).astype(jnp.bfloat16)

    # ----- single fused kernel launch -----------------------------------------
    outs = fused_ff_stack(
        z_pad, w0p, w_rest, biases, wcp,
        batch_size=batch_size, num_layers=num_layers, d_in=d_in, hidden=hidden,
        d_h_pad=d_h_pad, d_cls_pad=d_cls_pad, tile_rows=tile_rows,
        num_tiles=num_tiles, use_peer=use_peer)
    if use_peer:
        ss_slab, psum, cls_pad = outs
    else:
        ss_slab, cls_pad = outs
        psum = None

    # ----- FF (positive / negative) losses -------------------------------------
    posneg_labels = jnp.concatenate(
        [jnp.ones((batch_size,), jnp.float32),
         jnp.zeros((n_posneg - batch_size,), jnp.float32)], axis=0)

    scalar_outputs = {}
    total_loss = jnp.zeros((1,), jnp.float32)
    peer_norm_total = jnp.zeros((1,), jnp.float32)
    new_running_means = []

    for idx in range(num_layers):
        if use_peer:
            mean_activity = jnp.sum(psum[:, idx, :hidden], axis=0) / batch_size
            rm = running_means[idx] * momentum + mean_activity * (1.0 - momentum)
            new_running_means.append(rm)
            peer_loss = jnp.mean((jnp.mean(rm) - rm) ** 2)
            peer_norm_total = peer_norm_total + peer_loss
            total_loss = total_loss + peer_coef * peer_loss
        else:
            new_running_means.append(running_means[idx])

        logits = ss_slab[:n_posneg, idx] - hidden
        ff_loss = bce_with_logits(logits, posneg_labels)
        ff_acc = jnp.sum((jax.nn.sigmoid(logits) > 0.5)
                         == (posneg_labels > 0.5)).astype(jnp.float32) / n_posneg
        scalar_outputs[f"loss_layer_{idx}"] = ff_loss
        scalar_outputs[f"ff_accuracy_layer_{idx}"] = ff_acc
        total_loss = total_loss + ff_loss

    # ----- downstream classification (neutral rows) ----------------------------
    out = cls_pad[n_posneg:n_total, :n_classes]
    out = out - jnp.max(out, axis=-1, keepdims=True)
    cls_labels = labels["class_labels"]
    classification_loss = cross_entropy(out, cls_labels)
    classification_accuracy = jnp.mean(
        (jnp.argmax(out, axis=-1) == cls_labels).astype(jnp.float32))

    total_loss = total_loss + classification_loss
    scalar_outputs["Loss"] = total_loss
    scalar_outputs["Peer Normalization"] = peer_norm_total
    scalar_outputs["classification_loss"] = classification_loss
    scalar_outputs["classification_accuracy"] = classification_accuracy
    return scalar_outputs, new_running_means


# ----------------------------------------------------------------------------
# Deterministic parameter init (mirrors FF_model._init_weights)
# ----------------------------------------------------------------------------
def init_params(key, hidden_dim, num_layers, in_dim=784, n_classes=10):
    layers = []
    dims = [in_dim] + [hidden_dim] * num_layers
    for i in range(num_layers):
        key, sub = jax.random.split(key)
        # torch: normal(mean=0, std=1/sqrt(out_features)); stored as [in, out]
        w = jax.random.normal(sub, (dims[i], dims[i + 1]), jnp.float32) \
            * (1.0 / math.sqrt(dims[i + 1]))
        b = jnp.zeros((dims[i + 1],), jnp.float32)
        layers.append((w, b))
    cls_in = hidden_dim * (num_layers - 1)
    classifier = jnp.zeros((cls_in, n_classes), jnp.float32)  # torch zero-inits
    return {"layers": layers, "classifier": classifier}


# ----------------------------------------------------------------------------
if __name__ == "__main__":
    opt = {
        "batch_size": 4,
        "hidden_dim": 32,
        "num_layers": 3,
        "momentum": 0.9,
        "peer_normalization": 0.03,
    }

    key = jax.random.PRNGKey(0)
    k_params, k_pos, k_neg, k_neu, k_lab = jax.random.split(key, 5)

    params = init_params(k_params, opt["hidden_dim"], opt["num_layers"])
    running_means = [jnp.zeros((opt["hidden_dim"],), jnp.float32) + 0.5
                     for _ in range(opt["num_layers"])]

    B = opt["batch_size"]
    inputs = {
        "pos_images": jax.random.normal(k_pos, (B, 1, 28, 28), jnp.float32),
        "neg_images": jax.random.normal(k_neg, (B, 1, 28, 28), jnp.float32),
        "neutral_sample": jax.random.normal(k_neu, (B, 1, 28, 28), jnp.float32),
    }
    labels = {
        "class_labels": jax.random.randint(k_lab, (B,), 0, 10, jnp.int32),
    }

    scalar_outputs, new_running_means = ff_model_forward(
        params, running_means, inputs, labels, opt)
    jax.block_until_ready(scalar_outputs["Loss"])
    print("KERNEL_OK")
</pallas_src>

<mosaic_0001>
module attributes {stable_mosaic.version = 11 : i64} {
  func.func @_fused_ff_kernel(%arg0: i32, %arg1: memref<16x896xbf16, #tpu.memory_space<vmem>>, %arg2: memref<896x128xbf16, #tpu.memory_space<vmem>>, %arg3: memref<2x128x128xbf16, #tpu.memory_space<vmem>>, %arg4: memref<3x128xf32, #tpu.memory_space<vmem>>, %arg5: memref<256x128xbf16, #tpu.memory_space<vmem>>, %arg6: memref<16x128xf32, #tpu.memory_space<vmem>>, %arg7: memref<1x3x128xf32, #tpu.memory_space<vmem>>, %arg8: memref<16x128xf32, #tpu.memory_space<vmem>>) attributes {dimension_semantics = [#tpu.dimension_semantics<parallel>], iteration_bounds = array<i64: 1>, scalar_prefetch = 0 : i64, scratch_operands = 0 : i64, tpu.core_type = #tpu.core_type<tc>, window_params = [{transform_indices = @transform_0, window_bounds = array<i64: 16, 896>}, {pipeline_mode = #tpu.pipeline_mode<synchronous>, transform_indices = @transform_1, window_bounds = array<i64: 896, 128>}, {pipeline_mode = #tpu.pipeline_mode<synchronous>, transform_indices = @transform_2, window_bounds = array<i64: 2, 128, 128>}, {pipeline_mode = #tpu.pipeline_mode<synchronous>, transform_indices = @transform_3, window_bounds = array<i64: 3, 128>}, {pipeline_mode = #tpu.pipeline_mode<synchronous>, transform_indices = @transform_4, window_bounds = array<i64: 256, 128>}, {transform_indices = @transform_5, window_bounds = array<i64: 16, 128>}, {transform_indices = @transform_6, window_bounds = array<i64: 1, 3, 128>}, {transform_indices = @transform_7, window_bounds = array<i64: 16, 128>}]} {
    %c0 = arith.constant 0 : index
    %c0_0 = arith.constant 0 : index
    %0 = vector.load %arg1[%c0, %c0_0] : memref<16x896xbf16, #tpu.memory_space<vmem>>, vector<16x896xbf16>
    %1 = arith.extf %0 : vector<16x896xbf16> to vector<16x896xf32>
    %2 = arith.mulf %1, %1 : vector<16x896xf32>
    %cst = arith.constant dense<0.000000e+00> : vector<16xf32>
    %3 = vector.multi_reduction <add>, %2, %cst [1] : vector<16x896xf32> to vector<16xf32>
    %4 = vector.shape_cast %3 : vector<16xf32> to vector<16x1xf32>
    %cst_1 = arith.constant 0.00127551018 : f32
    %5 = vector.broadcast %cst_1 : f32 to vector<16x1xf32>
    %6 = arith.mulf %4, %5 : vector<16x1xf32>
    %7 = math.sqrt %6 : vector<16x1xf32>
    %cst_2 = arith.constant 9.99999993E-9 : f32
    %8 = vector.broadcast %cst_2 : f32 to vector<16x1xf32>
    %9 = arith.addf %7, %8 : vector<16x1xf32>
    %10 = tpu.reciprocal %9 {approx = true} : vector<16x1xf32> -> vector<16x1xf32>
    %11 = vector.broadcast %10 : vector<16x1xf32> to vector<16x896xf32>
    %12 = arith.mulf %1, %11 : vector<16x896xf32>
    %13 = arith.truncf %12 : vector<16x896xf32> to vector<16x896xbf16>
    %cst_3 = arith.constant 0.000000e+00 : f32
    %14 = vector.broadcast %cst_3 : f32 to vector<16x128xf32>
    %c0_4 = arith.constant 0 : index
    %c0_5 = arith.constant 0 : index
    %15 = vector.load %arg6[%c0_4, %c0_5] : memref<16x128xf32, #tpu.memory_space<vmem>>, vector<16x128xf32>
    tpu.vector_store %arg6[%c0_4, %c0_5], %14 {strides = array<i32>} : memref<16x128xf32, #tpu.memory_space<vmem>>, vector<16x128xf32>,
    %c16_i32 = arith.constant 16 : i32
    %16 = arith.muli %arg0, %c16_i32 : i32
    %17 = tpu.iota {dimensions = array<i32: 0>} : vector<16x1xi32>
    %18 = vector.broadcast %16 : i32 to vector<16x1xi32>
    %19 = arith.addi %18, %17 : vector<16x1xi32>
    %c4_i32 = arith.constant 4 : i32
    %20 = vector.broadcast %c4_i32 : i32 to vector<16x1xi32>
    %21 = arith.cmpi slt, %19, %20 : vector<16x1xi32>
    %22 = arith.extui %21 : vector<16x1xi1> to vector<16x1xi32>
    %23 = arith.sitofp %22 : vector<16x1xi32> to vector<16x1xf32>
    %24 = tpu.iota {dimensions = array<i32: 0>} : vector<3x128xi32>
    %cst_6 = arith.constant 0.000000e+00 : f32
    %25 = vector.broadcast %cst_6 : f32 to vector<3x128xf32>
    %c0_7 = arith.constant 0 : index
    %c0_8 = arith.constant 0 : index
    %26 = vector.load %arg2[%c0_7, %c0_8] : memref<896x128xbf16, #tpu.memory_space<vmem>>, vector<896x128xbf16>
    %cst_9 = arith.constant dense<0.000000e+00> : vector<16x128xf32>
    %27 = tpu.matmul %13, %26, %cst_9 {dimension_numbers = #tpu.dot_dimension_numbers<[1], [0], [0], [1], [0, 0, 1, 1], [], []>} : vector<16x896xbf16>, vector<896x128xbf16>, vector<16x128xf32> -> vector<16x128xf32>
    %c0_10 = arith.constant 0 : index
    %c0_11 = arith.constant 0 : index
    %28 = vector.load %arg4[%c0_10, %c0_11] : memref<3x128xf32, #tpu.memory_space<vmem>>, vector<1x128xf32>
    %29 = vector.broadcast %28 : vector<1x128xf32> to vector<16x128xf32>
    %30 = arith.addf %27, %29 : vector<16x128xf32>
    %cst_12 = arith.constant 0.000000e+00 : f32
    %31 = vector.broadcast %cst_12 : f32 to vector<16x128xf32>
    %32 = arith.maximumf %30, %31 : vector<16x128xf32>
    %33 = arith.mulf %32, %32 : vector<16x128xf32>
    %cst_13 = arith.constant dense<0.000000e+00> : vector<16xf32>
    %34 = vector.multi_reduction <add>, %33, %cst_13 [1] : vector<16x128xf32> to vector<16xf32>
    %35 = vector.shape_cast %34 : vector<16xf32> to vector<16x1xf32>
    %c0_14 = arith.constant 0 : index
    %c0_15 = arith.constant 0 : index
    %36 = vector.load %arg6[%c0_14, %c0_15] : memref<16x128xf32, #tpu.memory_space<vmem>>, vector<16x1xf32>
    tpu.vector_store %arg6[%c0_14, %c0_15], %35 {strides = array<i32>} : memref<16x128xf32, #tpu.memory_space<vmem>>, vector<16x1xf32>,
    %37 = vector.broadcast %23 : vector<16x1xf32> to vector<16x128xf32>
    %38 = arith.mulf %32, %37 : vector<16x128xf32>
    %cst_16 = arith.constant dense<0.000000e+00> : vector<128xf32>
    %39 = vector.multi_reduction <add>, %38, %cst_16 [0] : vector<16x128xf32> to vector<128xf32>
    %40 = vector.shape_cast %39 : vector<128xf32> to vector<1x128xf32>
    %c0_i32 = arith.constant 0 : i32
    %41 = vector.broadcast %c0_i32 : i32 to vector<3x128xi32>
    %42 = arith.cmpi eq, %24, %41 : vector<3x128xi32>
    %43 = vector.shape_cast %40 : vector<1x128xf32> to vector<1x128xf32>
    %44 = vector.broadcast %43 : vector<1x128xf32> to vector<3x128xf32>
    %45 = arith.select %42, %44, %25 : vector<3x128xi1>, vector<3x128xf32>
    %cst_17 = arith.constant 3.125000e-02 : f32
    %46 = vector.broadcast %cst_17 : f32 to vector<16x1xf32>
    %47 = arith.mulf %35, %46 : vector<16x1xf32>
    %48 = math.sqrt %47 : vector<16x1xf32>
    %cst_18 = arith.constant 9.99999993E-9 : f32
    %49 = vector.broadcast %cst_18 : f32 to vector<16x1xf32>
    %50 = arith.addf %48, %49 : vector<16x1xf32>
    %51 = tpu.reciprocal %50 {approx = true} : vector<16x1xf32> -> vector<16x1xf32>
    %52 = vector.broadcast %51 : vector<16x1xf32> to vector<16x128xf32>
    %53 = arith.mulf %32, %52 : vector<16x128xf32>
    %54 = arith.truncf %53 : vector<16x128xf32> to vector<16x128xbf16>
    %c0_19 = arith.constant 0 : index
    %c0_20 = arith.constant 0 : index
    %c0_21 = arith.constant 0 : index
    %55 = vector.load %arg3[%c0_19, %c0_20, %c0_21] : memref<2x128x128xbf16, #tpu.memory_space<vmem>>, vector<1x128x128xbf16>
    %56 = vector.shape_cast %55 : vector<1x128x128xbf16> to vector<128x128xbf16>
    %cst_22 = arith.constant dense<0.000000e+00> : vector<16x128xf32>
    %57 = tpu.matmul %54, %56, %cst_22 {dimension_numbers = #tpu.dot_dimension_numbers<[1], [0], [0], [1], [0, 0, 1, 1], [], []>} : vector<16x128xbf16>, vector<128x128xbf16>, vector<16x128xf32> -> vector<16x128xf32>
    %c1 = arith.constant 1 : index
    %c0_23 = arith.constant 0 : index
    %58 = vector.load %arg4[%c1, %c0_23] : memref<3x128xf32, #tpu.memory_space<vmem>>, vector<1x128xf32>
    %59 = vector.broadcast %58 : vector<1x128xf32> to vector<16x128xf32>
    %60 = arith.addf %57, %59 : vector<16x128xf32>
    %cst_24 = arith.constant 0.000000e+00 : f32
    %61 = vector.broadcast %cst_24 : f32 to vector<16x128xf32>
    %62 = arith.maximumf %60, %61 : vector<16x128xf32>
    %63 = arith.mulf %62, %62 : vector<16x128xf32>
    %cst_25 = arith.constant dense<0.000000e+00> : vector<16xf32>
    %64 = vector.multi_reduction <add>, %63, %cst_25 [1] : vector<16x128xf32> to vector<16xf32>
    %65 = vector.shape_cast %64 : vector<16xf32> to vector<16x1xf32>
    %c0_26 = arith.constant 0 : index
    %c1_27 = arith.constant 1 : index
    %66 = vector.load %arg6[%c0_26, %c1_27] : memref<16x128xf32, #tpu.memory_space<vmem>>, vector<16x1xf32>
    tpu.vector_store %arg6[%c0_26, %c1_27], %65 {strides = array<i32>} : memref<16x128xf32, #tpu.memory_space<vmem>>, vector<16x1xf32>,
    %67 = vector.broadcast %23 : vector<16x1xf32> to vector<16x128xf32>
    %68 = arith.mulf %62, %67 : vector<16x128xf32>
    %cst_28 = arith.constant dense<0.000000e+00> : vector<128xf32>
    %69 = vector.multi_reduction <add>, %68, %cst_28 [0] : vector<16x128xf32> to vector<128xf32>
    %70 = vector.shape_cast %69 : vector<128xf32> to vector<1x128xf32>
    %c1_i32 = arith.constant 1 : i32
    %71 = vector.broadcast %c1_i32 : i32 to vector<3x128xi32>
    %72 = arith.cmpi eq, %24, %71 : vector<3x128xi32>
    %73 = vector.shape_cast %70 : vector<1x128xf32> to vector<1x128xf32>
    %74 = vector.broadcast %73 : vector<1x128xf32> to vector<3x128xf32>
    %75 = arith.select %72, %74, %45 : vector<3x128xi1>, vector<3x128xf32>
    %cst_29 = arith.constant 3.125000e-02 : f32
    %76 = vector.broadcast %cst_29 : f32 to vector<16x1xf32>
    %77 = arith.mulf %65, %76 : vector<16x1xf32>
    %78 = math.sqrt %77 : vector<16x1xf32>
    %cst_30 = arith.constant 9.99999993E-9 : f32
    %79 = vector.broadcast %cst_30 : f32 to vector<16x1xf32>
    %80 = arith.addf %78, %79 : vector<16x1xf32>
    %81 = tpu.reciprocal %80 {approx = true} : vector<16x1xf32> -> vector<16x1xf32>
    %82 = vector.broadcast %81 : vector<16x1xf32> to vector<16x128xf32>
    %83 = arith.mulf %62, %82 : vector<16x128xf32>
    %84 = arith.truncf %83 : vector<16x128xf32> to vector<16x128xbf16>
    %c1_31 = arith.constant 1 : index
    %c0_32 = arith.constant 0 : index
    %c0_33 = arith.constant 0 : index
    %85 = vector.load %arg3[%c1_31, %c0_32, %c0_33] : memref<2x128x128xbf16, #tpu.memory_space<vmem>>, vector<1x128x128xbf16>
    %86 = vector.shape_cast %85 : vector<1x128x128xbf16> to vector<128x128xbf16>
    %cst_34 = arith.constant dense<0.000000e+00> : vector<16x128xf32>
    %87 = tpu.matmul %84, %86, %cst_34 {dimension_numbers = #tpu.dot_dimension_numbers<[1], [0], [0], [1], [0, 0, 1, 1], [], []>} : vector<16x128xbf16>, vector<128x128xbf16>, vector<16x128xf32> -> vector<16x128xf32>
    %c2 = arith.constant 2 : index
    %c0_35 = arith.constant 0 : index
    %88 = vector.load %arg4[%c2, %c0_35] : memref<3x128xf32, #tpu.memory_space<vmem>>, vector<1x128xf32>
    %89 = vector.broadcast %88 : vector<1x128xf32> to vector<16x128xf32>
    %90 = arith.addf %87, %89 : vector<16x128xf32>
    %cst_36 = arith.constant 0.000000e+00 : f32
    %91 = vector.broadcast %cst_36 : f32 to vector<16x128xf32>
    %92 = arith.maximumf %90, %91 : vector<16x128xf32>
    %93 = arith.mulf %92, %92 : vector<16x128xf32>
    %cst_37 = arith.constant dense<0.000000e+00> : vector<16xf32>
    %94 = vector.multi_reduction <add>, %93, %cst_37 [1] : vector<16x128xf32> to vector<16xf32>
    %95 = vector.shape_cast %94 : vector<16xf32> to vector<16x1xf32>
    %c0_38 = arith.constant 0 : index
    %c2_39 = arith.constant 2 : index
    %96 = vector.load %arg6[%c0_38, %c2_39] : memref<16x128xf32, #tpu.memory_space<vmem>>, vector<16x1xf32>
    tpu.vector_store %arg6[%c0_38, %c2_39], %95 {strides = array<i32>} : memref<16x128xf32, #tpu.memory_space<vmem>>, vector<16x1xf32>,
    %97 = vector.broadcast %23 : vector<16x1xf32> to vector<16x128xf32>
    %98 = arith.mulf %92, %97 : vector<16x128xf32>
    %cst_40 = arith.constant dense<0.000000e+00> : vector<128xf32>
    %99 = vector.multi_reduction <add>, %98, %cst_40 [0] : vector<16x128xf32> to vector<128xf32>
    %100 = vector.shape_cast %99 : vector<128xf32> to vector<1x128xf32>
    %c2_i32 = arith.constant 2 : i32
    %101 = vector.broadcast %c2_i32 : i32 to vector<3x128xi32>
    %102 = arith.cmpi eq, %24, %101 : vector<3x128xi32>
    %103 = vector.shape_cast %100 : vector<1x128xf32> to vector<1x128xf32>
    %104 = vector.broadcast %103 : vector<1x128xf32> to vector<3x128xf32>
    %105 = arith.select %102, %104, %75 : vector<3x128xi1>, vector<3x128xf32>
    %cst_41 = arith.constant 3.125000e-02 : f32
    %106 = vector.broadcast %cst_41 : f32 to vector<16x1xf32>
    %107 = arith.mulf %95, %106 : vector<16x1xf32>
    %108 = math.sqrt %107 : vector<16x1xf32>
    %cst_42 = arith.constant 9.99999993E-9 : f32
    %109 = vector.broadcast %cst_42 : f32 to vector<16x1xf32>
    %110 = arith.addf %108, %109 : vector<16x1xf32>
    %111 = tpu.reciprocal %110 {approx = true} : vector<16x1xf32> -> vector<16x1xf32>
    %112 = vector.broadcast %111 : vector<16x1xf32> to vector<16x128xf32>
    %113 = arith.mulf %92, %112 : vector<16x128xf32>
    %114 = arith.truncf %113 : vector<16x128xf32> to vector<16x128xbf16>
    %c0_43 = arith.constant 0 : index
    %c0_44 = arith.constant 0 : index
    %c0_45 = arith.constant 0 : index
    %115 = vector.load %arg7[%c0_43, %c0_44, %c0_45] : memref<1x3x128xf32, #tpu.memory_space<vmem>>, vector<1x3x128xf32>
    %116 = vector.shape_cast %115 : vector<1x3x128xf32> to vector<3x128xf32>
    %117 = vector.shape_cast %105 : vector<3x128xf32> to vector<1x3x128xf32>
    tpu.vector_store %arg7[%c0_43, %c0_44, %c0_45], %117 {strides = array<i32>} : memref<1x3x128xf32, #tpu.memory_space<vmem>>, vector<1x3x128xf32>,
    %118 = tpu.concatenate %84, %114 in 1 : vector<16x128xbf16>, vector<16x128xbf16> -> vector<16x256xbf16>
    %c0_46 = arith.constant 0 : index
    %c0_47 = arith.constant 0 : index
    %119 = vector.load %arg5[%c0_46, %c0_47] : memref<256x128xbf16, #tpu.memory_space<vmem>>, vector<256x128xbf16>
    %cst_48 = arith.constant dense<0.000000e+00> : vector<16x128xf32>
    %120 = tpu.matmul %118, %119, %cst_48 {dimension_numbers = #tpu.dot_dimension_numbers<[1], [0], [0], [1], [0, 0, 1, 1], [], []>} : vector<16x256xbf16>, vector<256x128xbf16>, vector<16x128xf32> -> vector<16x128xf32>
    %c0_49 = arith.constant 0 : index
    %c0_50 = arith.constant 0 : index
    %121 = vector.load %arg8[%c0_49, %c0_50] : memref<16x128xf32, #tpu.memory_space<vmem>>, vector<16x128xf32>
    tpu.vector_store %arg8[%c0_49, %c0_50], %120 {strides = array<i32>} : memref<16x128xf32, #tpu.memory_space<vmem>>, vector<16x128xf32>,
    return
  }
  func.func @transform_0(%arg0: i32) -> (i32, i32) {
    %c0_i32 = arith.constant 0 : i32
    %c0_i32_0 = arith.constant 0 : i32
    return %arg0, %c0_i32 : i32, i32
  }
  func.func @transform_1(%arg0: i32) -> (i32, i32) {
    %c0_i32 = arith.constant 0 : i32
    %c0_i32_0 = arith.constant 0 : i32
    %c0_i32_1 = arith.constant 0 : i32
    return %c0_i32, %c0_i32_0 : i32, i32
  }
  func.func @transform_2(%arg0: i32) -> (i32, i32, i32) {
    %c0_i32 = arith.constant 0 : i32
    %c0_i32_0 = arith.constant 0 : i32
    %c0_i32_1 = arith.constant 0 : i32
    %c0_i32_2 = arith.constant 0 : i32
    return %c0_i32, %c0_i32_0, %c0_i32_1 : i32, i32, i32
  }
  func.func @transform_3(%arg0: i32) -> (i32, i32) {
    %c0_i32 = arith.constant 0 : i32
    %c0_i32_0 = arith.constant 0 : i32
    %c0_i32_1 = arith.constant 0 : i32
    return %c0_i32, %c0_i32_0 : i32, i32
  }
  func.func @transform_4(%arg0: i32) -> (i32, i32) {
    %c0_i32 = arith.constant 0 : i32
    %c0_i32_0 = arith.constant 0 : i32
    %c0_i32_1 = arith.constant 0 : i32
    return %c0_i32, %c0_i32_0 : i32, i32
  }
  func.func @transform_5(%arg0: i32) -> (i32, i32) {
    %c0_i32 = arith.constant 0 : i32
    %c0_i32_0 = arith.constant 0 : i32
    return %arg0, %c0_i32 : i32, i32
  }
  func.func @transform_6(%arg0: i32) -> (i32, i32, i32) {
    %c0_i32 = arith.constant 0 : i32
    %c0_i32_0 = arith.constant 0 : i32
    %c0_i32_1 = arith.constant 0 : i32
    return %arg0, %c0_i32, %c0_i32_0 : i32, i32, i32
  }
  func.func @transform_7(%arg0: i32) -> (i32, i32) {
    %c0_i32 = arith.constant 0 : i32
    %c0_i32_0 = arith.constant 0 : i32
    return %arg0, %c0_i32 : i32, i32
  }
}

</mosaic_0001>

<llo_original>
// kernel: tpu_custom_call.1
$region0: #{tpu_custom_call.1}
  #allocation0 [shape = 'u32[]', space=smem, size = 0x4, offset = 0x4, fixed_abs, tag = 'smem constant byte address 0x4 - core index']
  #allocation1 [shape = 'u32[144,128]{1,0:T(1,128)}', space=vmem, size = 0x12000, scoped, tag = 'internal scratch']
  %s0 = inlined_call_operand.hbm [shape: bf16[16,896], index: 0, kind: input, shape index: {}]
  %s1 = inlined_call_operand.hbm [shape: bf16[896,128], index: 1, kind: input, shape index: {}]
  %s2 = inlined_call_operand.hbm [shape: bf16[2,128,128], index: 2, kind: input, shape index: {}]
  %s3 = inlined_call_operand.vmem [shape: f32[3,128], index: 3, kind: input, shape index: {}]
  %s4 = inlined_call_operand.hbm [shape: bf16[256,128], index: 4, kind: input, shape index: {}]
  %s5 = inlined_call_operand.hbm [shape: f32[16,128], index: 5, kind: output, shape index: {0}]
  %s6 = inlined_call_operand.vmem [shape: f32[1,3,128], index: 6, kind: output, shape index: {1}]
  %s7 = inlined_call_operand.hbm [shape: f32[16,128], index: 7, kind: output, shape index: {2}]
  %8 = xla_tuple %s5, %s6, %s7
  %s9 = sld [smem:[#allocation0]]
  $region62: #{tpu_custom_call.1} parent=0
    _
  %s11 = ssub.s32 1, %s9
  %s12 = scalar_select 0, %s11, %s9
  $region1: #{tpu_custom_call.1} parent=0
    #allocation2 [shape = 'u8[28672]{0}', space=vmem, size = 0x7000, scoped, tag = 'input window, operand 0, single buffered']
    #allocation3 [shape = 's32[1]{0}', space=sflag, size = 0x4, scoped, tag = 'scoped memory for tpu_custom_call.1']
    #allocation4 [shape = 's32[1]{0}', space=sflag, size = 0x4, scoped, tag = 'scoped memory for tpu_custom_call.1']
    #allocation5 [shape = 'u8[229376]{0}', space=vmem, size = 0x38000, scoped, tag = 'input window, operand 1, single buffered']
    #allocation6 [shape = 's32[1]{0}', space=sflag, size = 0x4, scoped, tag = 'scoped memory for tpu_custom_call.1']
    #allocation7 [shape = 'u8[65536]{0}', space=vmem, size = 0x10000, scoped, tag = 'input window, operand 2, single buffered']
    #allocation8 [shape = 'u8[65536]{0}', space=vmem, size = 0x10000, scoped, tag = 'input window, operand 4, single buffered']
    #allocation9 [shape = 's32[1]{0}', space=sflag, size = 0x4, scoped, tag = 'scoped memory for tpu_custom_call.1']
    #allocation10 [shape = 'u8[8192]{0}', space=vmem, size = 0x2000, scoped, tag = 'output window, operand 0, single buffered']
    #allocation11 [shape = 'u8[8192]{0}', space=vmem, size = 0x2000, scoped, tag = 'output window, operand 2, single buffered']
    #allocation12 [shape = 's32[1]{0}', space=sflag, size = 0x4, scoped, tag = 'scoped memory for tpu_custom_call.1']
    %13 = vsyncpa [#allocation3], 0
    %14 = vsyncpa [#allocation6], 0
    %15 = vsyncpa [#allocation9], 0
    %16 = vsyncpa [#allocation4], 0
    %17 = vsyncpa [#allocation12], 0
    // Predicated region
    $region2: #{tpu_custom_call.1} parent=1 // pred_check
      _
    $region3: #{tpu_custom_call.1} parent=1 // pred_check_branch
      %19 = sbr.rel (0) target = $region5
    $region4: #{tpu_custom_call.1} parent=1 // pred_region
      %s21 = ssub.s32 896, 896
      %22 = vsyncadd [#allocation3], %s21
      %s23 = sshll.u32 [#allocation2], 4
      %s24 = int_to_ptr.vmem [resolvable:$true] %s23
      %29 = dma.hbm_to_vmem [thread:$0]  %s0, 896, %s24, [#allocation3], 448, 448, 28
    $region5: #{tpu_custom_call.1} parent=1 // pred_fallthru
      _
    // Predicated region
    $region6: #{tpu_custom_call.1} parent=1 // pred_check
      _
    $region7: #{tpu_custom_call.1} parent=1 // pred_check_branch
      %31 = sbr.rel (0) target = $region9
    $region8: #{tpu_custom_call.1} parent=1 // pred_region
      %s33 = ssub.s32 7168, 7168
      %34 = vsyncadd [#allocation6], %s33
      %s35 = sshll.u32 [#allocation5], 4
      %s36 = int_to_ptr.vmem [resolvable:$true] %s35
      %41 = dma.hbm_to_vmem [thread:$0]  %s1, 7168, %s36, [#allocation6], 64, 64, 4
    $region9: #{tpu_custom_call.1} parent=1 // pred_fallthru
      _
    // Predicated region
    $region10: #{tpu_custom_call.1} parent=1 // pred_check
      _
    $region11: #{tpu_custom_call.1} parent=1 // pred_check_branch
      %43 = sbr.rel (0) target = $region13
    $region12: #{tpu_custom_call.1} parent=1 // pred_region
      %s45 = ssub.s32 2048, 2048
      %46 = vsyncadd [#allocation6], %s45
      %s47 = sshll.u32 [#allocation7], 4
      %s48 = int_to_ptr.vmem [resolvable:$true] %s47
      %53 = dma.hbm_to_vmem [thread:$0]  %s2, 2048, %s48, [#allocation6], 64, 64, 4
    $region13: #{tpu_custom_call.1} parent=1 // pred_fallthru
      _
    // Predicated region
    $region14: #{tpu_custom_call.1} parent=1 // pred_check
      _
    $region15: #{tpu_custom_call.1} parent=1 // pred_check_branch
      %55 = sbr.rel (0) target = $region17
    $region16: #{tpu_custom_call.1} parent=1 // pred_region
      _
    $region17: #{tpu_custom_call.1} parent=1 // pred_fallthru
      _
    // Predicated region
    $region18: #{tpu_custom_call.1} parent=1 // pred_check
      _
    $region19: #{tpu_custom_call.1} parent=1 // pred_check_branch
      %57 = sbr.rel (0) target = $region21
    $region20: #{tpu_custom_call.1} parent=1 // pred_region
      %s59 = ssub.s32 2048, 2048
      %60 = vsyncadd [#allocation9], %s59
      %s61 = sshll.u32 [#allocation8], 4
      %s62 = int_to_ptr.vmem [resolvable:$true] %s61
      %67 = dma.hbm_to_vmem [thread:$0]  %s4, 2048, %s62, [#allocation9], 64, 64, 4
    $region21: #{tpu_custom_call.1} parent=1 // pred_fallthru
      _
    // Predicated region
    $region22: #{tpu_custom_call.1} parent=1 // pred_check
      _
    $region23: #{tpu_custom_call.1} parent=1 // pred_check_branch
      %69 = sbr.rel (0) target = $region25
    $region24: #{tpu_custom_call.1} parent=1 // pred_region
      %70 = dma.done [#allocation3], 896
    $region25: #{tpu_custom_call.1} parent=1 // pred_fallthru
      _
    // Predicated region
    $region26: #{tpu_custom_call.1} parent=1 // pred_check
      _
    $region27: #{tpu_custom_call.1} parent=1 // pred_check_branch
      %72 = sbr.rel (0) target = $region29
    $region28: #{tpu_custom_call.1} parent=1 // pred_region
      %73 = dma.done [#allocation6], 7168
    $region29: #{tpu_custom_call.1} parent=1 // pred_fallthru
      _
    // Predicated region
    $region30: #{tpu_custom_call.1} parent=1 // pred_check
      _
    $region31: #{tpu_custom_call.1} parent=1 // pred_check_branch
      %75 = sbr.rel (0) target = $region33
    $region32: #{tpu_custom_call.1} parent=1 // pred_region
      %76 = dma.done [#allocation6], 2048
    $region33: #{tpu_custom_call.1} parent=1 // pred_fallthru
      _
    // Predicated region
    $region34: #{tpu_custom_call.1} parent=1 // pred_check
      _
    $region35: #{tpu_custom_call.1} parent=1 // pred_check_branch
      %78 = sbr.rel (0) target = $region37
    $region36: #{tpu_custom_call.1} parent=1 // pred_region
      %79 = dma.done [#allocation9], 2048
    $region37: #{tpu_custom_call.1} parent=1 // pred_fallthru
      _
    %v81 = vld [vmem:[#allocation2] sm:$0xff]
    %v82 = vld [vmem:[#allocation2 + $0x8] sm:$0xff]
    %v83 = vld [vmem:[#allocation2 + $0x10] sm:$0xff]
    %v84 = vld [vmem:[#allocation2 + $0x18] sm:$0xf]
    %v85 = vld [vmem:[#allocation2 + $0x1c] sm:$0xff]
    %v86 = vld [vmem:[#allocation2 + $0x24] sm:$0xff]
    %v87 = vld [vmem:[#allocation2 + $0x2c] sm:$0xff]
    %v88 = vld [vmem:[#allocation2 + $0x34] sm:$0xf]
    %v89 = vunpack.c.l.bf16 %v81
    %v90 = vunpack.c.h.bf16 %v81
    %v91 = vunpack.c.l.bf16 %v82
    %v92 = vunpack.c.h.bf16 %v82
    %v93 = vunpack.c.l.bf16 %v83
    %v94 = vunpack.c.h.bf16 %v83
    %v95 = vunpack.c.l.bf16 %v84
    %v96 = vunpack.c.l.bf16 %v85
    %v97 = vunpack.c.h.bf16 %v85
    %v98 = vunpack.c.l.bf16 %v86
    %v99 = vunpack.c.h.bf16 %v86
    %v100 = vunpack.c.l.bf16 %v87
    %v101 = vunpack.c.h.bf16 %v87
    %v102 = vunpack.c.l.bf16 %v88
    %v103 = vmul.f32 %v89, %v89
    %v104 = vmul.f32 %v90, %v90
    %v105 = vmul.f32 %v91, %v91
    %v106 = vmul.f32 %v92, %v92
    %v107 = vmul.f32 %v93, %v93
    %v108 = vmul.f32 %v94, %v94
    %v109 = vmul.f32 %v95, %v95
    %v110 = vmul.f32 %v96, %v96
    %v111 = vmul.f32 %v97, %v97
    %v112 = vmul.f32 %v98, %v98
    %v113 = vmul.f32 %v99, %v99
    %v114 = vmul.f32 %v100, %v100
    %v115 = vmul.f32 %v101, %v101
    %v116 = vmul.f32 %v102, %v102
    %v117 = vadd.f32 %v103, %v104
    %v118 = vadd.f32 %v117, %v105
    %v119 = vadd.f32 %v118, %v106
    %v120 = vadd.f32 %v119, %v107
    %v121 = vadd.f32 %v120, %v108
    %v122 = vadd.f32 %v121, %v109
    %123 = vadd.xlane.f32.xlu0 %v122
    %v124 = vpop.xlane.xlu0 %123
    %v125 = vadd.f32 %v110, %v111
    %v126 = vadd.f32 %v125, %v112
    %v127 = vadd.f32 %v126, %v113
    %v128 = vadd.f32 %v127, %v114
    %v129 = vadd.f32 %v128, %v115
    %v130 = vadd.f32 %v129, %v116
    %131 = vadd.xlane.f32.xlu0 %v130
    %v132 = vpop.xlane.xlu0 %131
    %v133 = vmul.f32 %v124, 0.0012755102
    %v134 = vmul.f32 %v132, 0.0012755102
    %v135 = vrsqrt.pop %v133
    %v136 = vmul.f32 %v133, %v135
    %vm137 = vcmp.eq.f32.partialorder %v133, inf
    %v138 = vsel %vm137, %v133, %v136
    %vm139 = vcmp.eq.f32.partialorder %v133, 0.0
    %v140 = vand.u32 %v133, 2147483648
    %v141 = vsel %vm139, %v140, %v138
    %v142 = vrsqrt.pop %v134
    %v143 = vmul.f32 %v134, %v142
    %vm144 = vcmp.eq.f32.partialorder %v134, inf
    %v145 = vsel %vm144, %v134, %v143
    %vm146 = vcmp.eq.f32.partialorder %v134, 0.0
    %v147 = vand.u32 %v134, 2147483648
    %v148 = vsel %vm146, %v147, %v145
    %v149 = vadd.f32 %v141, 1e-08
    %v150 = vadd.f32 %v148, 1e-08
    %v151 = vrcp.pop %v149
    %v152 = vrcp.pop %v150
    %v153 = vmul.f32 %v89, %v151
    %v154 = vmul.f32 %v90, %v151
    %v155 = vmul.f32 %v91, %v151
    %v156 = vmul.f32 %v92, %v151
    %v157 = vmul.f32 %v93, %v151
    %v158 = vmul.f32 %v94, %v151
    %v159 = vmul.f32 %v95, %v151
    %v160 = vmul.f32 %v96, %v152
    %v161 = vmul.f32 %v97, %v152
    %v162 = vmul.f32 %v98, %v152
    %v163 = vmul.f32 %v99, %v152
    %v164 = vmul.f32 %v100, %v152
    %v165 = vmul.f32 %v101, %v152
    %v166 = vmul.f32 %v102, %v152
    %v167 = vpack.c.bf16 %v160, %v153
    %v168 = vpack.c.bf16 %v161, %v154
    %v169 = vpack.c.bf16 %v162, %v155
    %v170 = vpack.c.bf16 %v163, %v156
    %v171 = vpack.c.bf16 %v164, %v157
    %v172 = vpack.c.bf16 %v165, %v158
    %v173 = vpack.c.bf16 %v166, %v159
    %174 = vst [vmem:[#allocation10] sm:$0xff] 0.0
    %175 = vst [vmem:[#allocation10 + $0x8] sm:$0xff] 0.0
    %s176 = smul.u32 0, 16
    %v177 = vlaneseq
    %v178 = vshrl.u32 %v177, 7
    %v179 = vadd.s32 %v178, 8
    %v180 = vstv %s176
    %v181 = vadd.s32 %v180, %v178
    %v182 = vadd.s32 %v180, %v179
    %vm183 = vcmp.lt.s32.totalorder %v181, 4
    %vm184 = vcmp.lt.s32.totalorder %v182, 4
    %v185 = vsel %vm183, 1, 0
    %v186 = vsel %vm184, 1, 0
    %v187 = vcvt.s32.f32 %v185
    %v188 = vcvt.s32.f32 %v186
    %v189 = vld [vmem:[#allocation5] sm:$0xf]
    %v190 = vld [vmem:[#allocation5 + $0x4] sm:$0xf]
    %v191 = vld [vmem:[#allocation5 + $0x8] sm:$0xf]
    %v192 = vld [vmem:[#allocation5 + $0xc] sm:$0xf]
    %v193 = vld [vmem:[#allocation5 + $0x10] sm:$0xf]
    %v194 = vld [vmem:[#allocation5 + $0x14] sm:$0xf]
    %v195 = vld [vmem:[#allocation5 + $0x18] sm:$0xf]
    %v196 = vld [vmem:[#allocation5 + $0x1c] sm:$0xf]
    %v197 = vld [vmem:[#allocation5 + $0x20] sm:$0xf]
    %v198 = vld [vmem:[#allocation5 + $0x24] sm:$0xf]
    %v199 = vld [vmem:[#allocation5 + $0x28] sm:$0xf]
    %v200 = vld [vmem:[#allocation5 + $0x2c] sm:$0xf]
    %v201 = vld [vmem:[#allocation5 + $0x30] sm:$0xf]
    %v202 = vld [vmem:[#allocation5 + $0x34] sm:$0xf]
    %v203 = vld [vmem:[#allocation5 + $0x38] sm:$0xf]
    %v204 = vld [vmem:[#allocation5 + $0x3c] sm:$0xf]
    %v205 = vld [vmem:[#allocation5 + $0x40] sm:$0xf]
    %v206 = vld [vmem:[#allocation5 + $0x44] sm:$0xf]
    %v207 = vld [vmem:[#allocation5 + $0x48] sm:$0xf]
    %v208 = vld [vmem:[#allocation5 + $0x4c] sm:$0xf]
    %v209 = vld [vmem:[#allocation5 + $0x50] sm:$0xf]
    %v210 = vld [vmem:[#allocation5 + $0x54] sm:$0xf]
    %v211 = vld [vmem:[#allocation5 + $0x58] sm:$0xf]
    %v212 = vld [vmem:[#allocation5 + $0x5c] sm:$0xf]
    %v213 = vld [vmem:[#allocation5 + $0x60] sm:$0xf]
    %v214 = vld [vmem:[#allocation5 + $0x64] sm:$0xf]
    %v215 = vld [vmem:[#allocation5 + $0x68] sm:$0xf]
    %v216 = vld [vmem:[#allocation5 + $0x6c] sm:$0xf]
    %v217 = vld [vmem:[#allocation5 + $0x70] sm:$0xf]
    %v218 = vld [vmem:[#allocation5 + $0x74] sm:$0xf]
    %v219 = vld [vmem:[#allocation5 + $0x78] sm:$0xf]
    %v220 = vld [vmem:[#allocation5 + $0x7c] sm:$0xf]
    %v221 = vld [vmem:[#allocation5 + $0x80] sm:$0xf]
    %v222 = vld [vmem:[#allocation5 + $0x84] sm:$0xf]
    %v223 = vld [vmem:[#allocation5 + $0x88] sm:$0xf]
    %v224 = vld [vmem:[#allocation5 + $0x8c] sm:$0xf]
    %v225 = vld [vmem:[#allocation5 + $0x90] sm:$0xf]
    %v226 = vld [vmem:[#allocation5 + $0x94] sm:$0xf]
    %v227 = vld [vmem:[#allocation5 + $0x98] sm:$0xf]
    %v228 = vld [vmem:[#allocation5 + $0x9c] sm:$0xf]
    %v229 = vld [vmem:[#allocation5 + $0xa0] sm:$0xf]
    %v230 = vld [vmem:[#allocation5 + $0xa4] sm:$0xf]
    %v231 = vld [vmem:[#allocation5 + $0xa8] sm:$0xf]
    %v232 = vld [vmem:[#allocation5 + $0xac] sm:$0xf]
    %v233 = vld [vmem:[#allocation5 + $0xb0] sm:$0xf]
    %v234 = vld [vmem:[#allocation5 + $0xb4] sm:$0xf]
    %v235 = vld [vmem:[#allocation5 + $0xb8] sm:$0xf]
    %v236 = vld [vmem:[#allocation5 + $0xbc] sm:$0xf]
    %v237 = vld [vmem:[#allocation5 + $0xc0] sm:$0xf]
    %v238 = vld [vmem:[#allocation5 + $0xc4] sm:$0xf]
    %v239 = vld [vmem:[#allocation5 + $0xc8] sm:$0xf]
    %v240 = vld [vmem:[#allocation5 + $0xcc] sm:$0xf]
    %v241 = vld [vmem:[#allocation5 + $0xd0] sm:$0xf]
    %v242 = vld [vmem:[#allocation5 + $0xd4] sm:$0xf]
    %v243 = vld [vmem:[#allocation5 + $0xd8] sm:$0xf]
    %v244 = vld [vmem:[#allocation5 + $0xdc] sm:$0xf]
    %v245 = vld [vmem:[#allocation5 + $0xe0] sm:$0xf]
    %v246 = vld [vmem:[#allocation5 + $0xe4] sm:$0xf]
    %v247 = vld [vmem:[#allocation5 + $0xe8] sm:$0xf]
    %v248 = vld [vmem:[#allocation5 + $0xec] sm:$0xf]
    %v249 = vld [vmem:[#allocation5 + $0xf0] sm:$0xf]
    %v250 = vld [vmem:[#allocation5 + $0xf4] sm:$0xf]
    %v251 = vld [vmem:[#allocation5 + $0xf8] sm:$0xf]
    %v252 = vld [vmem:[#allocation5 + $0xfc] sm:$0xf]
    %v253 = vld [vmem:[#allocation5 + $0x100] sm:$0xf]
    %v254 = vld [vmem:[#allocation5 + $0x104] sm:$0xf]
    %v255 = vld [vmem:[#allocation5 + $0x108] sm:$0xf]
    %v256 = vld [vmem:[#allocation5 + $0x10c] sm:$0xf]
    %v257 = vld [vmem:[#allocation5 + $0x110] sm:$0xf]
    %v258 = vld [vmem:[#allocation5 + $0x114] sm:$0xf]
    %v259 = vld [vmem:[#allocation5 + $0x118] sm:$0xf]
    %v260 = vld [vmem:[#allocation5 + $0x11c] sm:$0xf]
    %v261 = vld [vmem:[#allocation5 + $0x120] sm:$0xf]
    %v262 = vld [vmem:[#allocation5 + $0x124] sm:$0xf]
    %v263 = vld [vmem:[#allocation5 + $0x128] sm:$0xf]
    %v264 = vld [vmem:[#allocation5 + $0x12c] sm:$0xf]
    %v265 = vld [vmem:[#allocation5 + $0x130] sm:$0xf]
    %v266 = vld [vmem:[#allocation5 + $0x134] sm:$0xf]
    %v267 = vld [vmem:[#allocation5 + $0x138] sm:$0xf]
    %v268 = vld [vmem:[#allocation5 + $0x13c] sm:$0xf]
    %v269 = vld [vmem:[#allocation5 + $0x140] sm:$0xf]
    %v270 = vld [vmem:[#allocation5 + $0x144] sm:$0xf]
    %v271 = vld [vmem:[#allocation5 + $0x148] sm:$0xf]
    %v272 = vld [vmem:[#allocation5 + $0x14c] sm:$0xf]
    %v273 = vld [vmem:[#allocation5 + $0x150] sm:$0xf]
    %v274 = vld [vmem:[#allocation5 + $0x154] sm:$0xf]
    %v275 = vld [vmem:[#allocation5 + $0x158] sm:$0xf]
    %v276 = vld [vmem:[#allocation5 + $0x15c] sm:$0xf]
    %v277 = vld [vmem:[#allocation5 + $0x160] sm:$0xf]
    %v278 = vld [vmem:[#allocation5 + $0x164] sm:$0xf]
    %v279 = vld [vmem:[#allocation5 + $0x168] sm:$0xf]
    %v280 = vld [vmem:[#allocation5 + $0x16c] sm:$0xf]
    %v281 = vld [vmem:[#allocation5 + $0x170] sm:$0xf]
    %v282 = vld [vmem:[#allocation5 + $0x174] sm:$0xf]
    %v283 = vld [vmem:[#allocation5 + $0x178] sm:$0xf]
    %v284 = vld [vmem:[#allocation5 + $0x17c] sm:$0xf]
    %v285 = vld [vmem:[#allocation5 + $0x180] sm:$0xf]
    %v286 = vld [vmem:[#allocation5 + $0x184] sm:$0xf]
    %v287 = vld [vmem:[#allocation5 + $0x188] sm:$0xf]
    %v288 = vld [vmem:[#allocation5 + $0x18c] sm:$0xf]
    %v289 = vld [vmem:[#allocation5 + $0x190] sm:$0xf]
    %v290 = vld [vmem:[#allocation5 + $0x194] sm:$0xf]
    %v291 = vld [vmem:[#allocation5 + $0x198] sm:$0xf]
    %v292 = vld [vmem:[#allocation5 + $0x19c] sm:$0xf]
    %v293 = vld [vmem:[#allocation5 + $0x1a0] sm:$0xf]
    %v294 = vld [vmem:[#allocation5 + $0x1a4] sm:$0xf]
    %v295 = vld [vmem:[#allocation5 + $0x1a8] sm:$0xf]
    %v296 = vld [vmem:[#allocation5 + $0x1ac] sm:$0xf]
    %v297 = vld [vmem:[#allocation5 + $0x1b0] sm:$0xf]
    %v298 = vld [vmem:[#allocation5 + $0x1b4] sm:$0xf]
    %v299 = vld [vmem:[#allocation5 + $0x1b8] sm:$0xf]
    %v300 = vld [vmem:[#allocation5 + $0x1bc] sm:$0xf]
    %v301 = vld [vmem:[%s3] sm:$0x1]
    %v302 = vlaneseq
    %v303 = vshrl.u32 %v302, 7
    %v304 = vsub.s32 0, %v303
    %v305 = vrot.slane %v301, %v304
    %v418 = vunpack.c.l.b16 %v189
    %v419 = vunpack.c.l.b16 %v190
    %v420 = vunpack.c.l.b16 %v191
    %v421 = vunpack.c.l.b16 %v192
    %v422 = vunpack.c.l.b16 %v193
    %v423 = vunpack.c.l.b16 %v194
    %v424 = vunpack.c.l.b16 %v195
    %v425 = vunpack.c.l.b16 %v196
    %v426 = vunpack.c.l.b16 %v197
    %v427 = vunpack.c.l.b16 %v198
    %v428 = vunpack.c.l.b16 %v199
    %v429 = vunpack.c.l.b16 %v200
    %v430 = vunpack.c.l.b16 %v201
    %v431 = vunpack.c.l.b16 %v202
    %v432 = vunpack.c.l.b16 %v203
    %v433 = vunpack.c.l.b16 %v204
    %v434 = vunpack.c.l.b16 %v205
    %v435 = vunpack.c.l.b16 %v206
    %v436 = vunpack.c.l.b16 %v207
    %v437 = vunpack.c.l.b16 %v208
    %v438 = vunpack.c.l.b16 %v209
    %v439 = vunpack.c.l.b16 %v210
    %v440 = vunpack.c.l.b16 %v211
    %v441 = vunpack.c.l.b16 %v212
    %v442 = vunpack.c.l.b16 %v213
    %v443 = vunpack.c.l.b16 %v214
    %v444 = vunpack.c.l.b16 %v215
    %v445 = vunpack.c.l.b16 %v216
    %v446 = vunpack.c.l.b16 %v217
    %v447 = vunpack.c.l.b16 %v218
    %v448 = vunpack.c.l.b16 %v219
    %v449 = vunpack.c.l.b16 %v220
    %v450 = vunpack.c.l.b16 %v221
    %v451 = vunpack.c.l.b16 %v222
    %v452 = vunpack.c.l.b16 %v223
    %v453 = vunpack.c.l.b16 %v224
    %v454 = vunpack.c.l.b16 %v225
    %v455 = vunpack.c.l.b16 %v226
    %v456 = vunpack.c.l.b16 %v227
    %v457 = vunpack.c.l.b16 %v228
    %v458 = vunpack.c.l.b16 %v229
    %v459 = vunpack.c.l.b16 %v230
    %v460 = vunpack.c.l.b16 %v231
    %v461 = vunpack.c.l.b16 %v232
    %v462 = vunpack.c.l.b16 %v233
    %v463 = vunpack.c.l.b16 %v234
    %v464 = vunpack.c.l.b16 %v235
    %v465 = vunpack.c.l.b16 %v236
    %v466 = vunpack.c.l.b16 %v237
    %v467 = vunpack.c.l.b16 %v238
    %v468 = vunpack.c.l.b16 %v239
    %v469 = vunpack.c.l.b16 %v240
    %v470 = vunpack.c.l.b16 %v241
    %v471 = vunpack.c.l.b16 %v242
    %v472 = vunpack.c.l.b16 %v243
    %v473 = vunpack.c.l.b16 %v244
    %v474 = vunpack.c.l.b16 %v245
    %v475 = vunpack.c.l.b16 %v246
    %v476 = vunpack.c.l.b16 %v247
    %v477 = vunpack.c.l.b16 %v248
    %v478 = vunpack.c.l.b16 %v249
    %v479 = vunpack.c.l.b16 %v250
    %v480 = vunpack.c.l.b16 %v251
    %v481 = vunpack.c.l.b16 %v252
    %v482 = vunpack.c.l.b16 %v253
    %v483 = vunpack.c.l.b16 %v254
    %v484 = vunpack.c.l.b16 %v255
    %v485 = vunpack.c.l.b16 %v256
    %v486 = vunpack.c.l.b16 %v257
    %v487 = vunpack.c.l.b16 %v258
    %v488 = vunpack.c.l.b16 %v259
    %v489 = vunpack.c.l.b16 %v260
    %v490 = vunpack.c.l.b16 %v261
    %v491 = vunpack.c.l.b16 %v262
    %v492 = vunpack.c.l.b16 %v263
    %v493 = vunpack.c.l.b16 %v264
    %v494 = vunpack.c.l.b16 %v265
    %v495 = vunpack.c.l.b16 %v266
    %v496 = vunpack.c.l.b16 %v267
    %v497 = vunpack.c.l.b16 %v268
    %v498 = vunpack.c.l.b16 %v269
    %v499 = vunpack.c.l.b16 %v270
    %v500 = vunpack.c.l.b16 %v271
    %v501 = vunpack.c.l.b16 %v272
    %v502 = vunpack.c.l.b16 %v273
    %v503 = vunpack.c.l.b16 %v274
    %v504 = vunpack.c.l.b16 %v275
    %v505 = vunpack.c.l.b16 %v276
    %v506 = vunpack.c.l.b16 %v277
    %v507 = vunpack.c.l.b16 %v278
    %v508 = vunpack.c.l.b16 %v279
    %v509 = vunpack.c.l.b16 %v280
    %v510 = vunpack.c.l.b16 %v281
    %v511 = vunpack.c.l.b16 %v282
    %v512 = vunpack.c.l.b16 %v283
    %v513 = vunpack.c.l.b16 %v284
    %v514 = vunpack.c.l.b16 %v285
    %v515 = vunpack.c.l.b16 %v286
    %v516 = vunpack.c.l.b16 %v287
    %v517 = vunpack.c.l.b16 %v288
    %v518 = vunpack.c.l.b16 %v289
    %v519 = vunpack.c.l.b16 %v290
    %v520 = vunpack.c.l.b16 %v291
    %v521 = vunpack.c.l.b16 %v292
    %v522 = vunpack.c.l.b16 %v293
    %v523 = vunpack.c.l.b16 %v294
    %v524 = vunpack.c.l.b16 %v295
    %v525 = vunpack.c.l.b16 %v296
    %v526 = vunpack.c.l.b16 %v297
    %v527 = vunpack.c.l.b16 %v298
    %v528 = vunpack.c.l.b16 %v299
    %v529 = vunpack.c.l.b16 %v300
    %v530 = vpack.c.b16 %v419, %v418
    %v531 = vpack.c.b16 %v421, %v420
    %v532 = vpack.c.b16 %v423, %v422
    %v533 = vpack.c.b16 %v425, %v424
    %v534 = vpack.c.b16 %v427, %v426
    %v535 = vpack.c.b16 %v429, %v428
    %v536 = vpack.c.b16 %v431, %v430
    %v537 = vpack.c.b16 %v433, %v432
    %v538 = vpack.c.b16 %v435, %v434
    %v539 = vpack.c.b16 %v437, %v436
    %v540 = vpack.c.b16 %v439, %v438
    %v541 = vpack.c.b16 %v441, %v440
    %v542 = vpack.c.b16 %v443, %v442
    %v543 = vpack.c.b16 %v445, %v444
    %v544 = vpack.c.b16 %v447, %v446
    %v545 = vpack.c.b16 %v449, %v448
    %v546 = vpack.c.b16 %v451, %v450
    %v547 = vpack.c.b16 %v453, %v452
    %v548 = vpack.c.b16 %v455, %v454
    %v549 = vpack.c.b16 %v457, %v456
    %v550 = vpack.c.b16 %v459, %v458
    %v551 = vpack.c.b16 %v461, %v460
    %v552 = vpack.c.b16 %v463, %v462
    %v553 = vpack.c.b16 %v465, %v464
    %v554 = vpack.c.b16 %v467, %v466
    %v555 = vpack.c.b16 %v469, %v468
    %v556 = vpack.c.b16 %v471, %v470
    %v557 = vpack.c.b16 %v473, %v472
    %v558 = vpack.c.b16 %v475, %v474
    %v559 = vpack.c.b16 %v477, %v476
    %v560 = vpack.c.b16 %v479, %v478
    %v561 = vpack.c.b16 %v481, %v480
    %v562 = vpack.c.b16 %v483, %v482
    %v563 = vpack.c.b16 %v485, %v484
    %v564 = vpack.c.b16 %v487, %v486
    %v565 = vpack.c.b16 %v489, %v488
    %v566 = vpack.c.b16 %v491, %v490
    %v567 = vpack.c.b16 %v493, %v492
    %v568 = vpack.c.b16 %v495, %v494
    %v569 = vpack.c.b16 %v497, %v496
    %v570 = vpack.c.b16 %v499, %v498
    %v571 = vpack.c.b16 %v501, %v500
    %v572 = vpack.c.b16 %v503, %v502
    %v573 = vpack.c.b16 %v505, %v504
    %v574 = vpack.c.b16 %v507, %v506
    %v575 = vpack.c.b16 %v509, %v508
    %v576 = vpack.c.b16 %v511, %v510
    %v577 = vpack.c.b16 %v513, %v512
    %v578 = vpack.c.b16 %v515, %v514
    %v579 = vpack.c.b16 %v517, %v516
    %v580 = vpack.c.b16 %v519, %v518
    %v581 = vpack.c.b16 %v521, %v520
    %v582 = vpack.c.b16 %v523, %v522
    %v583 = vpack.c.b16 %v525, %v524
    %v584 = vpack.c.b16 %v527, %v526
    %v585 = vpack.c.b16 %v529, %v528
    %642 = vmatprep.subr.bf16.mxu0 0
    %643 = vmatpush1.bf16.msra.mxu0 %v537
    %644 = vmatprep.subr.bf16.mxu0 0
    %645 = vmatpush1.bf16.msra.mxu0 %v536
    %646 = vmatprep.subr.bf16.mxu0 0
    %647 = vmatpush1.bf16.msra.mxu0 %v535
    %648 = vmatprep.subr.bf16.mxu0 0
    %649 = vmatpush1.bf16.msra.mxu0 %v534
    %650 = vmatprep.subr.bf16.mxu0 0
    %651 = vmatpush1.bf16.msra.mxu0 %v533
    %652 = vmatprep.subr.bf16.mxu0 0
    %653 = vmatpush1.bf16.msra.mxu0 %v532
    %654 = vmatprep.subr.bf16.mxu0 0
    %655 = vmatpush1.bf16.msra.mxu0 %v531
    %656 = vmatprep.subr.bf16.mxu0 0
    %657 = vmatpush1.bf16.msra.mxu0 %v530
    %658 = vmatprep.subr.bf16.mxu0 0
    %659 = vmatpush2.bf16.msra.mxu0 %v545
    %660 = vmatprep.subr.bf16.mxu0 0
    %661 = vmatpush2.bf16.msra.mxu0 %v544
    %662 = vmatprep.subr.bf16.mxu0 0
    %663 = vmatpush2.bf16.msra.mxu0 %v543
    %664 = vmatprep.subr.bf16.mxu0 0
    %665 = vmatpush2.bf16.msra.mxu0 %v542
    %666 = vmatprep.subr.bf16.mxu0 0
    %667 = vmatpush2.bf16.msra.mxu0 %v541
    %668 = vmatprep.subr.bf16.mxu0 0
    %669 = vmatpush2.bf16.msra.mxu0 %v540
    %670 = vmatprep.subr.bf16.mxu0 0
    %671 = vmatpush2.bf16.msra.mxu0 %v539
    %672 = vmatprep.subr.bf16.mxu0 0
    %673 = vmatpush2.bf16.msra.mxu0 %v538
    %674 = vmatprep.mubr.bf16.mxu0 %v168
    %675 = vmatmul.mubr.bf16.gmra.mxu0 %v167
    %v676 = vpop.f32.mrf.mxu0
    %v677 = vadd.f32 %v305, %v676
    %v678 = vpop.f32.mrf.mxu0
    %v679 = vpop.f32.mrf.mxu0
    %v680 = vadd.f32 %v305, %v679
    %v681 = vpop.f32.mrf.mxu0
    %682 = vdwg.mxu0
    %683 = vmatprep.subr.bf16.mxu0 0
    %684 = vmatpush1.bf16.msra.mxu0 %v553
    %685 = vmatprep.subr.bf16.mxu0 0
    %686 = vmatpush1.bf16.msra.mxu0 %v552
    %687 = vmatprep.subr.bf16.mxu0 0
    %688 = vmatpush1.bf16.msra.mxu0 %v551
    %689 = vmatprep.subr.bf16.mxu0 0
    %690 = vmatpush1.bf16.msra.mxu0 %v550
    %691 = vmatprep.subr.bf16.mxu0 0
    %692 = vmatpush1.bf16.msra.mxu0 %v549
    %693 = vmatprep.subr.bf16.mxu0 0
    %694 = vmatpush1.bf16.msra.mxu0 %v548
    %695 = vmatprep.subr.bf16.mxu0 0
    %696 = vmatpush1.bf16.msra.mxu0 %v547
    %697 = vmatprep.subr.bf16.mxu0 0
    %698 = vmatpush1.bf16.msra.mxu0 %v546
    %699 = vmatprep.subr.bf16.mxu0 0
    %700 = vmatpush2.bf16.msra.mxu0 %v561
    %701 = vmatprep.subr.bf16.mxu0 0
    %702 = vmatpush2.bf16.msra.mxu0 %v560
    %703 = vmatprep.subr.bf16.mxu0 0
    %704 = vmatpush2.bf16.msra.mxu0 %v559
    %705 = vmatprep.subr.bf16.mxu0 0
    %706 = vmatpush2.bf16.msra.mxu0 %v558
    %707 = vmatprep.subr.bf16.mxu0 0
    %708 = vmatpush2.bf16.msra.mxu0 %v557
    %709 = vmatprep.subr.bf16.mxu0 0
    %710 = vmatpush2.bf16.msra.mxu0 %v556
    %711 = vmatprep.subr.bf16.mxu0 0
    %712 = vmatpush2.bf16.msra.mxu0 %v555
    %713 = vmatprep.subr.bf16.mxu0 0
    %714 = vmatpush2.bf16.msra.mxu0 %v554
    %715 = vmatprep.mubr.bf16.mxu0 %v170
    %716 = vmatmul.mubr.bf16.gmra.mxu0 %v169
    %v717 = vpop.f32.mrf.mxu0
    %v718 = vadd.f32 %v677, %v717
    %v719 = vpop.f32.mrf.mxu0
    %v720 = vpop.f32.mrf.mxu0
    %v721 = vadd.f32 %v680, %v720
    %v722 = vpop.f32.mrf.mxu0
    %723 = vdwg.mxu0
    %724 = vmatprep.subr.bf16.mxu0 0
    %725 = vmatpush1.bf16.msra.mxu0 %v569
    %726 = vmatprep.subr.bf16.mxu0 0
    %727 = vmatpush1.bf16.msra.mxu0 %v568
    %728 = vmatprep.subr.bf16.mxu0 0
    %729 = vmatpush1.bf16.msra.mxu0 %v567
    %730 = vmatprep.subr.bf16.mxu0 0
    %731 = vmatpush1.bf16.msra.mxu0 %v566
    %732 = vmatprep.subr.bf16.mxu0 0
    %733 = vmatpush1.bf16.msra.mxu0 %v565
    %734 = vmatprep.subr.bf16.mxu0 0
    %735 = vmatpush1.bf16.msra.mxu0 %v564
    %736 = vmatprep.subr.bf16.mxu0 0
    %737 = vmatpush1.bf16.msra.mxu0 %v563
    %738 = vmatprep.subr.bf16.mxu0 0
    %739 = vmatpush1.bf16.msra.mxu0 %v562
    %740 = vmatprep.subr.bf16.mxu0 0
    %741 = vmatpush2.bf16.msra.mxu0 %v577
    %742 = vmatprep.subr.bf16.mxu0 0
    %743 = vmatpush2.bf16.msra.mxu0 %v576
    %744 = vmatprep.subr.bf16.mxu0 0
    %745 = vmatpush2.bf16.msra.mxu0 %v575
    %746 = vmatprep.subr.bf16.mxu0 0
    %747 = vmatpush2.bf16.msra.mxu0 %v574
    %748 = vmatprep.subr.bf16.mxu0 0
    %749 = vmatpush2.bf16.msra.mxu0 %v573
    %750 = vmatprep.subr.bf16.mxu0 0
    %751 = vmatpush2.bf16.msra.mxu0 %v572
    %752 = vmatprep.subr.bf16.mxu0 0
    %753 = vmatpush2.bf16.msra.mxu0 %v571
    %754 = vmatprep.subr.bf16.mxu0 0
    %755 = vmatpush2.bf16.msra.mxu0 %v570
    %756 = vmatprep.mubr.bf16.mxu0 %v172
    %757 = vmatmul.mubr.bf16.gmra.mxu0 %v171
    %v758 = vpop.f32.mrf.mxu0
    %v759 = vadd.f32 %v718, %v758
    %v760 = vpop.f32.mrf.mxu0
    %v761 = vpop.f32.mrf.mxu0
    %v762 = vadd.f32 %v721, %v761
    %v763 = vpop.f32.mrf.mxu0
    %764 = vdwg.mxu0
    %765 = vmatprep.subr.bf16.mxu0 0
    %766 = vmatpush1.bf16.msra.mxu0 %v585
    %767 = vmatprep.subr.bf16.mxu0 0
    %768 = vmatpush1.bf16.msra.mxu0 %v584
    %769 = vmatprep.subr.bf16.mxu0 0
    %770 = vmatpush1.bf16.msra.mxu0 %v583
    %771 = vmatprep.subr.bf16.mxu0 0
    %772 = vmatpush1.bf16.msra.mxu0 %v582
    %773 = vmatprep.subr.bf16.mxu0 0
    %774 = vmatpush1.bf16.msra.mxu0 %v581
    %775 = vmatprep.subr.bf16.mxu0 0
    %776 = vmatpush1.bf16.msra.mxu0 %v580
    %777 = vmatprep.subr.bf16.mxu0 0
    %778 = vmatpush1.bf16.msra.mxu0 %v579
    %779 = vmatprep.subr.bf16.mxu0 0
    %780 = vmatpush1.bf16.msra.mxu0 %v578
    %781 = vmatprep.subr.bf16.mxu0 0
    %782 = vmatpush2.bf16.msra.mxu0 0
    %783 = vmatprep.subr.bf16.mxu0 0
    %784 = vmatpush2.bf16.msra.mxu0 0
    %785 = vmatprep.subr.bf16.mxu0 0
    %786 = vmatpush2.bf16.msra.mxu0 0
    %787 = vmatprep.subr.bf16.mxu0 0
    %788 = vmatpush2.bf16.msra.mxu0 0
    %789 = vmatprep.subr.bf16.mxu0 0
    %790 = vmatpush2.bf16.msra.mxu0 0
    %791 = vmatprep.subr.bf16.mxu0 0
    %792 = vmatpush2.bf16.msra.mxu0 0
    %793 = vmatprep.subr.bf16.mxu0 0
    %794 = vmatpush2.bf16.msra.mxu0 0
    %795 = vmatprep.subr.bf16.mxu0 0
    %796 = vmatpush2.bf16.msra.mxu0 0
    %797 = vmatprep.mubr.bf16.mxu0 0
    %798 = vmatmul.mubr.bf16.gmra.mxu0 %v173
    %v799 = vpop.f32.mrf.mxu0
    %v800 = vadd.f32 %v759, %v799
    %v801 = vpop.f32.mrf.mxu0
    %v802 = vpop.f32.mrf.mxu0
    %v803 = vadd.f32 %v762, %v802
    %v804 = vpop.f32.mrf.mxu0
    %805 = vdwg.mxu0
    %v806 = vmax.f32 %v800, 0.0
    %v807 = vmax.f32 %v803, 0.0
    %v808 = vmul.f32 %v806, %v806
    %v809 = vmul.f32 %v807, %v807
    %810 = vadd.xlane.f32.xlu0 %v808
    %v811 = vpop.xlane.xlu0 %810
    %812 = vadd.xlane.f32.xlu0 %v809
    %v813 = vpop.xlane.xlu0 %812
    %vm814 = vcmask 7168
    %815 = vst.msk [vmem:[#allocation10] sm:$0xff] %vm814, %v811
    %816 = vst.msk [vmem:[#allocation10 + $0x8] sm:$0xff] %vm814, %v813
    %v817 = vmul.f32 %v806, %v187
    %v818 = vmul.f32 %v807, %v188
    %v819 = vadd.f32 %v817, %v818
    %v820 = vrot.slane %v819, 4
    %v821 = vadd.f32 %v819, %v820
    %v822 = vrot.slane %v821, 2
    %v823 = vadd.f32 %v821, %v822
    %v824 = vrot.slane %v823, 1
    %v825 = vadd.f32 %v823, %v824
    %vm826 = vcmp.eq.s32.totalorder %v178, 0
    %v827 = vsel %vm826, %v825, 0.0
    %v828 = vmul.f32 %v811, 0.03125
    %v829 = vmul.f32 %v813, 0.03125
    %v830 = vrsqrt.pop %v828
    %v831 = vmul.f32 %v828, %v830
    %vm832 = vcmp.eq.f32.partialorder %v828, inf
    %v833 = vsel %vm832, %v828, %v831
    %vm834 = vcmp.eq.f32.partialorder %v828, 0.0
    %v835 = vand.u32 %v828, 2147483648
    %v836 = vsel %vm834, %v835, %v833
    %v837 = vrsqrt.pop %v829
    %v838 = vmul.f32 %v829, %v837
    %vm839 = vcmp.eq.f32.partialorder %v829, inf
    %v840 = vsel %vm839, %v829, %v838
    %vm841 = vcmp.eq.f32.partialorder %v829, 0.0
    %v842 = vand.u32 %v829, 2147483648
    %v843 = vsel %vm841, %v842, %v840
    %v844 = vadd.f32 %v836, 1e-08
    %v845 = vadd.f32 %v843, 1e-08
    %v846 = vrcp.pop %v844
    %v847 = vrcp.pop %v845
    %v848 = vmul.f32 %v806, %v846
    %v849 = vmul.f32 %v807, %v847
    %v850 = vpack.c.bf16 %v849, %v848
    %v851 = vld [vmem:[#allocation7] sm:$0xf]
    %v852 = vld [vmem:[#allocation7 + $0x4] sm:$0xf]
    %v853 = vld [vmem:[#allocation7 + $0x8] sm:$0xf]
    %v854 = vld [vmem:[#allocation7 + $0xc] sm:$0xf]
    %v855 = vld [vmem:[#allocation7 + $0x10] sm:$0xf]
    %v856 = vld [vmem:[#allocation7 + $0x14] sm:$0xf]
    %v857 = vld [vmem:[#allocation7 + $0x18] sm:$0xf]
    %v858 = vld [vmem:[#allocation7 + $0x1c] sm:$0xf]
    %v859 = vld [vmem:[#allocation7 + $0x20] sm:$0xf]
    %v860 = vld [vmem:[#allocation7 + $0x24] sm:$0xf]
    %v861 = vld [vmem:[#allocation7 + $0x28] sm:$0xf]
    %v862 = vld [vmem:[#allocation7 + $0x2c] sm:$0xf]
    %v863 = vld [vmem:[#allocation7 + $0x30] sm:$0xf]
    %v864 = vld [vmem:[#allocation7 + $0x34] sm:$0xf]
    %v865 = vld [vmem:[#allocation7 + $0x38] sm:$0xf]
    %v866 = vld [vmem:[#allocation7 + $0x3c] sm:$0xf]
    %v867 = vld [vmem:[%s3 + $0x1] sm:$0x1]
    %v868 = vlaneseq
    %v869 = vshrl.u32 %v868, 7
    %v870 = vsub.s32 0, %v869
    %v871 = vrot.slane %v867, %v870
    %v888 = vunpack.c.l.b16 %v851
    %v889 = vunpack.c.l.b16 %v852
    %v890 = vunpack.c.l.b16 %v853
    %v891 = vunpack.c.l.b16 %v854
    %v892 = vunpack.c.l.b16 %v855
    %v893 = vunpack.c.l.b16 %v856
    %v894 = vunpack.c.l.b16 %v857
    %v895 = vunpack.c.l.b16 %v858
    %v896 = vunpack.c.l.b16 %v859
    %v897 = vunpack.c.l.b16 %v860
    %v898 = vunpack.c.l.b16 %v861
    %v899 = vunpack.c.l.b16 %v862
    %v900 = vunpack.c.l.b16 %v863
    %v901 = vunpack.c.l.b16 %v864
    %v902 = vunpack.c.l.b16 %v865
    %v903 = vunpack.c.l.b16 %v866
    %v904 = vpack.c.b16 %v889, %v888
    %v905 = vpack.c.b16 %v891, %v890
    %v906 = vpack.c.b16 %v893, %v892
    %v907 = vpack.c.b16 %v895, %v894
    %v908 = vpack.c.b16 %v897, %v896
    %v909 = vpack.c.b16 %v899, %v898
    %v910 = vpack.c.b16 %v901, %v900
    %v911 = vpack.c.b16 %v903, %v902
    %920 = vmatprep.subr.bf16.mxu0 0
    %921 = vmatpush1.bf16.msra.mxu0 %v911
    %922 = vmatprep.subr.bf16.mxu0 0
    %923 = vmatpush1.bf16.msra.mxu0 %v910
    %924 = vmatprep.subr.bf16.mxu0 0
    %925 = vmatpush1.bf16.msra.mxu0 %v909
    %926 = vmatprep.subr.bf16.mxu0 0
    %927 = vmatpush1.bf16.msra.mxu0 %v908
    %928 = vmatprep.subr.bf16.mxu0 0
    %929 = vmatpush1.bf16.msra.mxu0 %v907
    %930 = vmatprep.subr.bf16.mxu0 0
    %931 = vmatpush1.bf16.msra.mxu0 %v906
    %932 = vmatprep.subr.bf16.mxu0 0
    %933 = vmatpush1.bf16.msra.mxu0 %v905
    %934 = vmatprep.subr.bf16.mxu0 0
    %935 = vmatpush1.bf16.msra.mxu0 %v904
    %936 = vmatprep.subr.bf16.mxu0 0
    %937 = vmatpush2.bf16.msra.mxu0 0
    %938 = vmatprep.subr.bf16.mxu0 0
    %939 = vmatpush2.bf16.msra.mxu0 0
    %940 = vmatprep.subr.bf16.mxu0 0
    %941 = vmatpush2.bf16.msra.mxu0 0
    %942 = vmatprep.subr.bf16.mxu0 0
    %943 = vmatpush2.bf16.msra.mxu0 0
    %944 = vmatprep.subr.bf16.mxu0 0
    %945 = vmatpush2.bf16.msra.mxu0 0
    %946 = vmatprep.subr.bf16.mxu0 0
    %947 = vmatpush2.bf16.msra.mxu0 0
    %948 = vmatprep.subr.bf16.mxu0 0
    %949 = vmatpush2.bf16.msra.mxu0 0
    %950 = vmatprep.subr.bf16.mxu0 0
    %951 = vmatpush2.bf16.msra.mxu0 0
    %952 = vmatprep.mubr.bf16.mxu0 0
    %953 = vmatmul.mubr.bf16.gmra.mxu0 %v850
    %v954 = vpop.f32.mrf.mxu0
    %v955 = vadd.f32 %v871, %v954
    %v956 = vpop.f32.mrf.mxu0
    %v957 = vpop.f32.mrf.mxu0
    %v958 = vadd.f32 %v871, %v957
    %v959 = vpop.f32.mrf.mxu0
    %960 = vdwg.mxu0
    %v961 = vmax.f32 %v955, 0.0
    %v962 = vmax.f32 %v958, 0.0
    %v963 = vmul.f32 %v961, %v961
    %v964 = vmul.f32 %v962, %v962
    %965 = vadd.xlane.f32.xlu0 %v963
    %v966 = vpop.xlane.xlu0 %965
    %967 = vadd.xlane.f32.xlu0 %v964
    %v968 = vpop.xlane.xlu0 %967
    %vm969 = vcmask 15368
    %970 = vst.msk [vmem:[#allocation10] sm:$0xff] %vm969, %v966
    %971 = vst.msk [vmem:[#allocation10 + $0x8] sm:$0xff] %vm969, %v968
    %v972 = vmul.f32 %v961, %v187
    %v973 = vmul.f32 %v962, %v188
    %v974 = vadd.f32 %v972, %v973
    %v975 = vrot.slane %v974, 4
    %v976 = vadd.f32 %v974, %v975
    %v977 = vrot.slane %v976, 2
    %v978 = vadd.f32 %v976, %v977
    %v979 = vrot.slane %v978, 1
    %v980 = vadd.f32 %v978, %v979
    %vm981 = vcmp.eq.s32.totalorder %v178, 1
    %v982 = vsel %vm981, %v980, %v827
    %v983 = vmul.f32 %v966, 0.03125
    %v984 = vmul.f32 %v968, 0.03125
    %v985 = vrsqrt.pop %v983
    %v986 = vmul.f32 %v983, %v985
    %vm987 = vcmp.eq.f32.partialorder %v983, inf
    %v988 = vsel %vm987, %v983, %v986
    %vm989 = vcmp.eq.f32.partialorder %v983, 0.0
    %v990 = vand.u32 %v983, 2147483648
    %v991 = vsel %vm989, %v990, %v988
    %v992 = vrsqrt.pop %v984
    %v993 = vmul.f32 %v984, %v992
    %vm994 = vcmp.eq.f32.partialorder %v984, inf
    %v995 = vsel %vm994, %v984, %v993
    %vm996 = vcmp.eq.f32.partialorder %v984, 0.0
    %v997 = vand.u32 %v984, 2147483648
    %v998 = vsel %vm996, %v997, %v995
    %v999 = vadd.f32 %v991, 1e-08
    %v1000 = vadd.f32 %v998, 1e-08
    %v1001 = vrcp.pop %v999
    %v1002 = vrcp.pop %v1000
    %v1003 = vmul.f32 %v961, %v1001
    %v1004 = vmul.f32 %v962, %v1002
    %v1005 = vpack.c.bf16 %v1004, %v1003
    %s1006 = scalar_lea.vmem [#allocation7], 64
    %v1007 = vld [vmem:[%s1006] sm:$0xf]
    %v1008 = vld [vmem:[%s1006 + $0x4] sm:$0xf]
    %v1009 = vld [vmem:[%s1006 + $0x8] sm:$0xf]
    %v1010 = vld [vmem:[%s1006 + $0xc] sm:$0xf]
    %v1011 = vld [vmem:[%s1006 + $0x10] sm:$0xf]
    %v1012 = vld [vmem:[%s1006 + $0x14] sm:$0xf]
    %v1013 = vld [vmem:[%s1006 + $0x18] sm:$0xf]
    %v1014 = vld [vmem:[%s1006 + $0x1c] sm:$0xf]
    %v1015 = vld [vmem:[%s1006 + $0x20] sm:$0xf]
    %v1016 = vld [vmem:[%s1006 + $0x24] sm:$0xf]
    %v1017 = vld [vmem:[%s1006 + $0x28] sm:$0xf]
    %v1018 = vld [vmem:[%s1006 + $0x2c] sm:$0xf]
    %v1019 = vld [vmem:[%s1006 + $0x30] sm:$0xf]
    %v1020 = vld [vmem:[%s1006 + $0x34] sm:$0xf]
    %v1021 = vld [vmem:[%s1006 + $0x38] sm:$0xf]
    %v1022 = vld [vmem:[%s1006 + $0x3c] sm:$0xf]
    %v1023 = vld [vmem:[%s3 + $0x2] sm:$0x1]
    %v1024 = vlaneseq
    %v1025 = vshrl.u32 %v1024, 7
    %v1026 = vsub.s32 0, %v1025
    %v1027 = vrot.slane %v1023, %v1026
    %v1044 = vunpack.c.l.b16 %v1007
    %v1045 = vunpack.c.l.b16 %v1008
    %v1046 = vunpack.c.l.b16 %v1009
    %v1047 = vunpack.c.l.b16 %v1010
    %v1048 = vunpack.c.l.b16 %v1011
    %v1049 = vunpack.c.l.b16 %v1012
    %v1050 = vunpack.c.l.b16 %v1013
    %v1051 = vunpack.c.l.b16 %v1014
    %v1052 = vunpack.c.l.b16 %v1015
    %v1053 = vunpack.c.l.b16 %v1016
    %v1054 = vunpack.c.l.b16 %v1017
    %v1055 = vunpack.c.l.b16 %v1018
    %v1056 = vunpack.c.l.b16 %v1019
    %v1057 = vunpack.c.l.b16 %v1020
    %v1058 = vunpack.c.l.b16 %v1021
    %v1059 = vunpack.c.l.b16 %v1022
    %v1060 = vpack.c.b16 %v1045, %v1044
    %v1061 = vpack.c.b16 %v1047, %v1046
    %v1062 = vpack.c.b16 %v1049, %v1048
    %v1063 = vpack.c.b16 %v1051, %v1050
    %v1064 = vpack.c.b16 %v1053, %v1052
    %v1065 = vpack.c.b16 %v1055, %v1054
    %v1066 = vpack.c.b16 %v1057, %v1056
    %v1067 = vpack.c.b16 %v1059, %v1058
    %1076 = vmatprep.subr.bf16.mxu0 0
    %1077 = vmatpush1.bf16.msra.mxu0 %v1067
    %1078 = vmatprep.subr.bf16.mxu0 0
    %1079 = vmatpush1.bf16.msra.mxu0 %v1066
    %1080 = vmatprep.subr.bf16.mxu0 0
    %1081 = vmatpush1.bf16.msra.mxu0 %v1065
    %1082 = vmatprep.subr.bf16.mxu0 0
    %1083 = vmatpush1.bf16.msra.mxu0 %v1064
    %1084 = vmatprep.subr.bf16.mxu0 0
    %1085 = vmatpush1.bf16.msra.mxu0 %v1063
    %1086 = vmatprep.subr.bf16.mxu0 0
    %1087 = vmatpush1.bf16.msra.mxu0 %v1062
    %1088 = vmatprep.subr.bf16.mxu0 0
    %1089 = vmatpush1.bf16.msra.mxu0 %v1061
    %1090 = vmatprep.subr.bf16.mxu0 0
    %1091 = vmatpush1.bf16.msra.mxu0 %v1060
    %1092 = vmatprep.subr.bf16.mxu0 0
    %1093 = vmatpush2.bf16.msra.mxu0 0
    %1094 = vmatprep.subr.bf16.mxu0 0
    %1095 = vmatpush2.bf16.msra.mxu0 0
    %1096 = vmatprep.subr.bf16.mxu0 0
    %1097 = vmatpush2.bf16.msra.mxu0 0
    %1098 = vmatprep.subr.bf16.mxu0 0
    %1099 = vmatpush2.bf16.msra.mxu0 0
    %1100 = vmatprep.subr.bf16.mxu0 0
    %1101 = vmatpush2.bf16.msra.mxu0 0
    %1102 = vmatprep.subr.bf16.mxu0 0
    %1103 = vmatpush2.bf16.msra.mxu0 0
    %1104 = vmatprep.subr.bf16.mxu0 0
    %1105 = vmatpush2.bf16.msra.mxu0 0
    %1106 = vmatprep.subr.bf16.mxu0 0
    %1107 = vmatpush2.bf16.msra.mxu0 0
    %1108 = vmatprep.mubr.bf16.mxu0 0
    %1109 = vmatmul.mubr.bf16.gmra.mxu0 %v1005
    %v1110 = vpop.f32.mrf.mxu0
    %v1111 = vadd.f32 %v1027, %v1110
    %v1112 = vpop.f32.mrf.mxu0
    %v1113 = vpop.f32.mrf.mxu0
    %v1114 = vadd.f32 %v1027, %v1113
    %v1115 = vpop.f32.mrf.mxu0
    %1116 = vdwg.mxu0
    %v1117 = vmax.f32 %v1111, 0.0
    %v1118 = vmax.f32 %v1114, 0.0
    %v1119 = vmul.f32 %v1117, %v1117
    %v1120 = vmul.f32 %v1118, %v1118
    %1121 = vadd.xlane.f32.xlu0 %v1119
    %v1122 = vpop.xlane.xlu0 %1121
    %1123 = vadd.xlane.f32.xlu0 %v1120
    %v1124 = vpop.xlane.xlu0 %1123
    %vm1125 = vcmask 23568
    %1126 = vst.msk [vmem:[#allocation10] sm:$0xff] %vm1125, %v1122
    %1127 = vst.msk [vmem:[#allocation10 + $0x8] sm:$0xff] %vm1125, %v1124
    %v1128 = vmul.f32 %v1117, %v187
    %v1129 = vmul.f32 %v1118, %v188
    %v1130 = vadd.f32 %v1128, %v1129
    %v1131 = vrot.slane %v1130, 4
    %v1132 = vadd.f32 %v1130, %v1131
    %v1133 = vrot.slane %v1132, 2
    %v1134 = vadd.f32 %v1132, %v1133
    %v1135 = vrot.slane %v1134, 1
    %v1136 = vadd.f32 %v1134, %v1135
    %vm1137 = vcmp.eq.s32.totalorder %v178, 2
    %v1138 = vsel %vm1137, %v1136, %v982
    %v1139 = vmul.f32 %v1122, 0.03125
    %v1140 = vmul.f32 %v1124, 0.03125
    %v1141 = vrsqrt.pop %v1139
    %v1142 = vmul.f32 %v1139, %v1141
    %vm1143 = vcmp.eq.f32.partialorder %v1139, inf
    %v1144 = vsel %vm1143, %v1139, %v1142
    %vm1145 = vcmp.eq.f32.partialorder %v1139, 0.0
    %v1146 = vand.u32 %v1139, 2147483648
    %v1147 = vsel %vm1145, %v1146, %v1144
    %v1148 = vrsqrt.pop %v1140
    %v1149 = vmul.f32 %v1140, %v1148
    %vm1150 = vcmp.eq.f32.partialorder %v1140, inf
    %v1151 = vsel %vm1150, %v1140, %v1149
    %vm1152 = vcmp.eq.f32.partialorder %v1140, 0.0
    %v1153 = vand.u32 %v1140, 2147483648
    %v1154 = vsel %vm1152, %v1153, %v1151
    %v1155 = vadd.f32 %v1147, 1e-08
    %v1156 = vadd.f32 %v1154, 1e-08
    %v1157 = vrcp.pop %v1155
    %v1158 = vrcp.pop %v1156
    %v1159 = vmul.f32 %v1117, %v1157
    %v1160 = vmul.f32 %v1118, %v1158
    %v1161 = vpack.c.bf16 %v1160, %v1159
    %1162 = vst [vmem:[%s6] sm:$0x7] %v1138
    %v1163 = vld [vmem:[#allocation8] sm:$0xf]
    %v1164 = vld [vmem:[#allocation8 + $0x4] sm:$0xf]
    %v1165 = vld [vmem:[#allocation8 + $0x8] sm:$0xf]
    %v1166 = vld [vmem:[#allocation8 + $0xc] sm:$0xf]
    %v1167 = vld [vmem:[#allocation8 + $0x10] sm:$0xf]
    %v1168 = vld [vmem:[#allocation8 + $0x14] sm:$0xf]
    %v1169 = vld [vmem:[#allocation8 + $0x18] sm:$0xf]
    %v1170 = vld [vmem:[#allocation8 + $0x1c] sm:$0xf]
    %v1171 = vld [vmem:[#allocation8 + $0x20] sm:$0xf]
    %v1172 = vld [vmem:[#allocation8 + $0x24] sm:$0xf]
    %v1173 = vld [vmem:[#allocation8 + $0x28] sm:$0xf]
    %v1174 = vld [vmem:[#allocation8 + $0x2c] sm:$0xf]
    %v1175 = vld [vmem:[#allocation8 + $0x30] sm:$0xf]
    %v1176 = vld [vmem:[#allocation8 + $0x34] sm:$0xf]
    %v1177 = vld [vmem:[#allocation8 + $0x38] sm:$0xf]
    %v1178 = vld [vmem:[#allocation8 + $0x3c] sm:$0xf]
    %v1179 = vld [vmem:[#allocation8 + $0x40] sm:$0xf]
    %v1180 = vld [vmem:[#allocation8 + $0x44] sm:$0xf]
    %v1181 = vld [vmem:[#allocation8 + $0x48] sm:$0xf]
    %v1182 = vld [vmem:[#allocation8 + $0x4c] sm:$0xf]
    %v1183 = vld [vmem:[#allocation8 + $0x50] sm:$0xf]
    %v1184 = vld [vmem:[#allocation8 + $0x54] sm:$0xf]
    %v1185 = vld [vmem:[#allocation8 + $0x58] sm:$0xf]
    %v1186 = vld [vmem:[#allocation8 + $0x5c] sm:$0xf]
    %v1187 = vld [vmem:[#allocation8 + $0x60] sm:$0xf]
    %v1188 = vld [vmem:[#allocation8 + $0x64] sm:$0xf]
    %v1189 = vld [vmem:[#allocation8 + $0x68] sm:$0xf]
    %v1190 = vld [vmem:[#allocation8 + $0x6c] sm:$0xf]
    %v1191 = vld [vmem:[#allocation8 + $0x70] sm:$0xf]
    %v1192 = vld [vmem:[#allocation8 + $0x74] sm:$0xf]
    %v1193 = vld [vmem:[#allocation8 + $0x78] sm:$0xf]
    %v1194 = vld [vmem:[#allocation8 + $0x7c] sm:$0xf]
    %v1227 = vunpack.c.l.b16 %v1163
    %v1228 = vunpack.c.l.b16 %v1164
    %v1229 = vunpack.c.l.b16 %v1165
    %v1230 = vunpack.c.l.b16 %v1166
    %v1231 = vunpack.c.l.b16 %v1167
    %v1232 = vunpack.c.l.b16 %v1168
    %v1233 = vunpack.c.l.b16 %v1169
    %v1234 = vunpack.c.l.b16 %v1170
    %v1235 = vunpack.c.l.b16 %v1171
    %v1236 = vunpack.c.l.b16 %v1172
    %v1237 = vunpack.c.l.b16 %v1173
    %v1238 = vunpack.c.l.b16 %v1174
    %v1239 = vunpack.c.l.b16 %v1175
    %v1240 = vunpack.c.l.b16 %v1176
    %v1241 = vunpack.c.l.b16 %v1177
    %v1242 = vunpack.c.l.b16 %v1178
    %v1243 = vunpack.c.l.b16 %v1179
    %v1244 = vunpack.c.l.b16 %v1180
    %v1245 = vunpack.c.l.b16 %v1181
    %v1246 = vunpack.c.l.b16 %v1182
    %v1247 = vunpack.c.l.b16 %v1183
    %v1248 = vunpack.c.l.b16 %v1184
    %v1249 = vunpack.c.l.b16 %v1185
    %v1250 = vunpack.c.l.b16 %v1186
    %v1251 = vunpack.c.l.b16 %v1187
    %v1252 = vunpack.c.l.b16 %v1188
    %v1253 = vunpack.c.l.b16 %v1189
    %v1254 = vunpack.c.l.b16 %v1190
    %v1255 = vunpack.c.l.b16 %v1191
    %v1256 = vunpack.c.l.b16 %v1192
    %v1257 = vunpack.c.l.b16 %v1193
    %v1258 = vunpack.c.l.b16 %v1194
    %v1259 = vpack.c.b16 %v1228, %v1227
    %v1260 = vpack.c.b16 %v1230, %v1229
    %v1261 = vpack.c.b16 %v1232, %v1231
    %v1262 = vpack.c.b16 %v1234, %v1233
    %v1263 = vpack.c.b16 %v1236, %v1235
    %v1264 = vpack.c.b16 %v1238, %v1237
    %v1265 = vpack.c.b16 %v1240, %v1239
    %v1266 = vpack.c.b16 %v1242, %v1241
    %v1267 = vpack.c.b16 %v1244, %v1243
    %v1268 = vpack.c.b16 %v1246, %v1245
    %v1269 = vpack.c.b16 %v1248, %v1247
    %v1270 = vpack.c.b16 %v1250, %v1249
    %v1271 = vpack.c.b16 %v1252, %v1251
    %v1272 = vpack.c.b16 %v1254, %v1253
    %v1273 = vpack.c.b16 %v1256, %v1255
    %v1274 = vpack.c.b16 %v1258, %v1257
    %1291 = vmatprep.subr.bf16.mxu0 0
    %1292 = vmatpush1.bf16.msra.mxu0 %v1266
    %1293 = vmatprep.subr.bf16.mxu0 0
    %1294 = vmatpush1.bf16.msra.mxu0 %v1265
    %1295 = vmatprep.subr.bf16.mxu0 0
    %1296 = vmatpush1.bf16.msra.mxu0 %v1264
    %1297 = vmatprep.subr.bf16.mxu0 0
    %1298 = vmatpush1.bf16.msra.mxu0 %v1263
    %1299 = vmatprep.subr.bf16.mxu0 0
    %1300 = vmatpush1.bf16.msra.mxu0 %v1262
    %1301 = vmatprep.subr.bf16.mxu0 0
    %1302 = vmatpush1.bf16.msra.mxu0 %v1261
    %1303 = vmatprep.subr.bf16.mxu0 0
    %1304 = vmatpush1.bf16.msra.mxu0 %v1260
    %1305 = vmatprep.subr.bf16.mxu0 0
    %1306 = vmatpush1.bf16.msra.mxu0 %v1259
    %1307 = vmatprep.subr.bf16.mxu0 0
    %1308 = vmatpush2.bf16.msra.mxu0 %v1274
    %1309 = vmatprep.subr.bf16.mxu0 0
    %1310 = vmatpush2.bf16.msra.mxu0 %v1273
    %1311 = vmatprep.subr.bf16.mxu0 0
    %1312 = vmatpush2.bf16.msra.mxu0 %v1272
    %1313 = vmatprep.subr.bf16.mxu0 0
    %1314 = vmatpush2.bf16.msra.mxu0 %v1271
    %1315 = vmatprep.subr.bf16.mxu0 0
    %1316 = vmatpush2.bf16.msra.mxu0 %v1270
    %1317 = vmatprep.subr.bf16.mxu0 0
    %1318 = vmatpush2.bf16.msra.mxu0 %v1269
    %1319 = vmatprep.subr.bf16.mxu0 0
    %1320 = vmatpush2.bf16.msra.mxu0 %v1268
    %1321 = vmatprep.subr.bf16.mxu0 0
    %1322 = vmatpush2.bf16.msra.mxu0 %v1267
    %1323 = vmatprep.mubr.bf16.mxu0 %v1161
    %1324 = vmatmul.mubr.bf16.gmra.mxu0 %v1005
    %v1325 = vpop.f32.mrf.mxu0
    %v1326 = vadd.f32 0.0, %v1325
    %v1327 = vpop.f32.mrf.mxu0
    %v1328 = vpop.f32.mrf.mxu0
    %v1329 = vadd.f32 0.0, %v1328
    %v1330 = vpop.f32.mrf.mxu0
    %1331 = vdwg.mxu0
    %1332 = vst [vmem:[#allocation11] sm:$0xff] %v1326
    %1333 = vst [vmem:[#allocation11 + $0x8] sm:$0xff] %v1329
    // Predicated region
    $region38: #{tpu_custom_call.1} parent=1 // pred_check
      _
    $region39: #{tpu_custom_call.1} parent=1 // pred_check_branch
      %1335 = sbr.rel (0) target = $region41
    $region40: #{tpu_custom_call.1} parent=1 // pred_region
      %s1337 = ssub.s32 256, 256
      %1338 = vsyncadd [#allocation4], %s1337
      %s1339 = sshll.u32 [#allocation10], 4
      %s1340 = int_to_ptr.vmem [resolvable:$true] %s1339
      %1345 = dma.vmem_to_hbm [thread:$0]  %s1340, 256, %s5, [#allocation4], 128, 128, 8
    $region41: #{tpu_custom_call.1} parent=1 // pred_fallthru
      _
    // Predicated region
    $region42: #{tpu_custom_call.1} parent=1 // pred_check
      _
    $region43: #{tpu_custom_call.1} parent=1 // pred_check_branch
      %1347 = sbr.rel (0) target = $region45
    $region44: #{tpu_custom_call.1} parent=1 // pred_region
      _
    $region45: #{tpu_custom_call.1} parent=1 // pred_fallthru
      _
    // Predicated region
    $region46: #{tpu_custom_call.1} parent=1 // pred_check
      _
    $region47: #{tpu_custom_call.1} parent=1 // pred_check_branch
      %1349 = sbr.rel (0) target = $region49
    $region48: #{tpu_custom_call.1} parent=1 // pred_region
      %s1351 = ssub.s32 256, 256
      %1352 = vsyncadd [#allocation12], %s1351
      %s1353 = sshll.u32 [#allocation11], 4
      %s1354 = int_to_ptr.vmem [resolvable:$true] %s1353
      %1359 = dma.vmem_to_hbm [thread:$0]  %s1354, 256, %s7, [#allocation12], 128, 128, 8
    $region49: #{tpu_custom_call.1} parent=1 // pred_fallthru
      _
    // Predicated region
    $region50: #{tpu_custom_call.1} parent=1 // pred_check
      _
    $region51: #{tpu_custom_call.1} parent=1 // pred_check_branch
      %1361 = sbr.rel (0) target = $region53
    $region52: #{tpu_custom_call.1} parent=1 // pred_region
      %1362 = dma.done [#allocation4], 256
    $region53: #{tpu_custom_call.1} parent=1 // pred_fallthru
      _
    // Predicated region
    $region54: #{tpu_custom_call.1} parent=1 // pred_check
      _
    $region55: #{tpu_custom_call.1} parent=1 // pred_check_branch
      %1364 = sbr.rel (0) target = $region57
    $region56: #{tpu_custom_call.1} parent=1 // pred_region
      _
    $region57: #{tpu_custom_call.1} parent=1 // pred_fallthru
      _
    // Predicated region
    $region58: #{tpu_custom_call.1} parent=1 // pred_check
      _
    $region59: #{tpu_custom_call.1} parent=1 // pred_check_branch
      %1366 = sbr.rel (0) target = $region61
    $region60: #{tpu_custom_call.1} parent=1 // pred_region
      %1367 = dma.done [#allocation12], 256
    $region61: #{tpu_custom_call.1} parent=1 // pred_fallthru
      _
    %1368 = vsyncpa [#allocation3], 1
    %1369 = vsyncpa [#allocation6], 1
    %1370 = vsyncpa [#allocation9], 1
    %1371 = vsyncpa [#allocation4], 1
    %1372 = vsyncpa [#allocation12], 1

</llo_original>
